<compile_context>
chip_gen: v5e
topology: v5e:2x2
jax: 0.10.0
libtpu: 0.0.40
codegen_flags: <defaults>
</compile_context>

<pallas_src>
import functools

import jax
import jax.numpy as jnp
from jax.experimental import pallas as pl
from jax.experimental.pallas import tpu as pltpu

BN_EPS = 1e-5


def _round_up(v, m):
    return -(-v // m) * m


# ----------------------------- fused DenseBlock kernel -----------------------------

def _dense_block_kernel(x_ref, w1_ref, w2_ref, t1_ref, t2_ref, mask_ref, sel_ref,
                        o_ref, *, Bt, Np, Wp):
    """One grid step = Bt images, packed along lanes in a zero-gutter padded layout.

    x_ref   : [Cp, Bt*Np]    f32   activations (per image: (H+2)x(W+2) padded map on lanes)
    w1_ref  : [Cp, Cp]       bf16  1x1 conv weights, BN scale folded in
    w2_ref  : [Cp, 9*Cp]     bf16  3x3 conv weights in im2col (tap-major) layout, BN-folded
    t1/t2   : [Cp, 1]        f32   folded conv-bias + BN shift
    mask_ref: [1, Bt*Np]     f32   1 at interior pixels, 0 at gutters / lane padding
    sel_ref : [Np, Ho*Wo]    bf16  0/1 gather matrix compacting the 2x2 max-pooled lanes
    o_ref   : [Cp, Bt*Ho*Wo] f32   pooled block output
    """
    Lb = x_ref.shape[1]
    mask = mask_ref[...]
    t1 = t1_ref[...]
    t2 = t2_ref[...]
    w1 = w1_ref[...]
    w2 = w2_ref[...]

    def shifted(v, s):
        # value at position p becomes v[p + s]; for interior pixels this never crosses an
        # image boundary (the zero gutters absorb +-1 / +-Wp), so the wraparound is benign.
        return v if s == 0 else pltpu.roll(v, (-s) % Lb, 1)

    def conv1x1_bn_relu(v):
        h = jnp.dot(w1, v.astype(jnp.bfloat16), preferred_element_type=jnp.float32)
        return mask * jnp.maximum(h + t1, 0.0)

    def conv3x3_bn_relu(v, rezero_gutters=True):
        # im2col in registers: 9 rolled taps stacked along sublanes, one MXU dot (K=9*Cp).
        patches = jnp.concatenate(
            [shifted(v, dh * Wp + dw) for dh in (-1, 0, 1) for dw in (-1, 0, 1)],
            axis=0)
        h = jnp.dot(w2, patches.astype(jnp.bfloat16),
                    preferred_element_type=jnp.float32)
        h = jnp.maximum(h + t2, 0.0)
        # keep the zero-padding gutters exactly zero so the next conv's taps read zeros
        return mask * h if rezero_gutters else h

    x = x_ref[...]
    a = x + conv1x1_bn_relu(x)                       # x + y,   y = conv1(x)
    a = a + conv3x3_bn_relu(a)                       # + z,     z = conv2(x+y)
    a = a + conv3x3_bn_relu(a)                       # + e,     e = conv2(x+y+z)
    out = conv3x3_bn_relu(a, rezero_gutters=False)   # conv2(x+y+z+e); gutters unused below

    # Fused MaxPool2d(2,2): pairwise max along w then h via XLU rolls, then a per-image
    # 0/1 bf16 matmul gathers the (odd row, odd col) padded positions into [Cp, Ho*Wo].
    m1 = jnp.maximum(out, pltpu.roll(out, Lb - 1, 1))
    m2 = jnp.maximum(m1, pltpu.roll(m1, Lb - Wp, 1)).astype(jnp.bfloat16)
    sel = sel_ref[...]
    pooled = [jnp.dot(m2[:, b * Np:(b + 1) * Np], sel,
                      preferred_element_type=jnp.float32) for b in range(Bt)]
    o_ref[...] = jnp.concatenate(pooled, axis=1)
    # TODO(synk): Dropout in `downsample` is inference-mode identity here.


# ----------------------------- host wrapper -----------------------------

def dense_block_forward(params, x_nchw):
    B, Cin, H, W = x_nchw.shape
    w1, b1 = params["conv1_w"], params["conv1_b"]
    w2, b2 = params["conv2_w"], params["conv2_b"]
    Cout = w1.shape[0]
    assert Cin == Cout, "DenseBlock residual adds require inplanes == planes"
    assert H % 2 == 0 and W % 2 == 0

    Cp = _round_up(max(Cin, 8), 8)            # full f32 sublane tiles
    Hp, Wp = H + 2, W + 2
    Npad = Hp * Wp
    Np = _round_up(Npad, 128)                 # per-image lane span, lane-tile aligned
    Ho, Wo = H // 2, W // 2
    P = Ho * Wo

    # Fold conv bias + eval-mode BatchNorm: the scale goes into the conv weights
    # (exact: per-output-channel scaling commutes with conv), the shift stays.
    def fold(bias, bn):
        gamma, beta, mean, var = bn
        s = gamma / jnp.sqrt(var + BN_EPS)
        t = beta + (bias - mean) * s
        return s, t

    s1, t1 = fold(b1, params["bn1"])
    s2, t2 = fold(b2, params["bn2"])

    w1f = jnp.pad(w1[:, :, 0, 0] * s1[:, None],
                  ((0, Cp - Cout), (0, Cp - Cin))).astype(jnp.bfloat16)        # [Cp, Cp]
    w2f = jnp.pad(w2 * s2[:, None, None, None],
                  ((0, Cp - Cout), (0, Cp - Cin), (0, 0), (0, 0)))             # [Cp,Cp,3,3]
    w2cat = jnp.transpose(w2f, (0, 2, 3, 1)).reshape(Cp, 9 * Cp).astype(jnp.bfloat16)
    t1p = jnp.pad(t1, (0, Cp - Cout)).reshape(Cp, 1).astype(jnp.float32)
    t2p = jnp.pad(t2, (0, Cp - Cout)).reshape(Cp, 1).astype(jnp.float32)

    # Bt images per grid step, packed along lanes: smallest divisor of B that makes the
    # output block lane-dense (Bt*Ho*Wo >= 128) -> unmasked stores + amortized overhead.
    Bt = B
    for cand in range(1, B + 1):
        if B % cand == 0 and cand * P >= 128:
            Bt = cand
            break
    G = B // Bt
    Lb = Bt * Np

    # Activations: [G, Cp, Bt*Np] -- channels on sublanes, (image, padded pixel) on lanes.
    xp = jnp.pad(x_nchw.astype(jnp.float32),
                 ((0, 0), (0, Cp - Cin), (1, 1), (1, 1)))                      # [B,Cp,Hp,Wp]
    xp = jnp.pad(xp.reshape(B, Cp, Npad), ((0, 0), (0, 0), (0, Np - Npad)))
    xp = xp.reshape(G, Bt, Cp, Np).transpose(0, 2, 1, 3).reshape(G, Cp, Lb)

    # Gutter mask (1 at interior pixels) tiled over the Bt packed images.
    q = jnp.arange(Np)
    r, c = q // Wp, q % Wp
    interior = (q < Npad) & (r >= 1) & (r <= H) & (c >= 1) & (c <= W)
    mask = jnp.tile(interior.astype(jnp.float32), Bt).reshape(1, Lb)

    # Max-pool gather: pooled (ho, wo) lives at padded position (2ho+1, 2wo+1).
    j = jnp.arange(P)
    src = (2 * (j // Wo) + 1) * Wp + (2 * (j % Wo) + 1)
    sel = (q[:, None] == src[None, :]).astype(jnp.bfloat16)                    # [Np, P]

    kernel = functools.partial(_dense_block_kernel, Bt=Bt, Np=Np, Wp=Wp)
    out = pl.pallas_call(
        kernel,
        grid=(G,),
        in_specs=[
            pl.BlockSpec((None, Cp, Lb), lambda g: (g, 0, 0)),   # x (Bt packed images)
            pl.BlockSpec((Cp, Cp), lambda g: (0, 0)),            # conv1 weights (folded)
            pl.BlockSpec((Cp, 9 * Cp), lambda g: (0, 0)),        # conv2 weights (im2col)
            pl.BlockSpec((Cp, 1), lambda g: (0, 0)),             # shift 1
            pl.BlockSpec((Cp, 1), lambda g: (0, 0)),             # shift 2
            pl.BlockSpec((1, Lb), lambda g: (0, 0)),             # gutter mask
            pl.BlockSpec((Np, P), lambda g: (0, 0)),             # max-pool gather matrix
        ],
        out_specs=pl.BlockSpec((None, Cp, Bt * P), lambda g: (g, 0, 0)),
        out_shape=jax.ShapeDtypeStruct((G, Cp, Bt * P), jnp.float32),
        compiler_params=pltpu.CompilerParams(
            # NOTE: on v7x a multi-step batch grid should be split across the two
            # TensorCores (pltpu.CORE_PARALLEL); with the packed layout this demo is 1 step.
            dimension_semantics=("parallel",),
            vmem_limit_bytes=32 * 1024 * 1024),
    )(xp, w1f, w2cat, t1p, t2p, mask, sel)

    out = out.reshape(G, Cp, Bt, Ho, Wo).transpose(0, 2, 1, 3, 4)
    return out.reshape(B, Cp, Ho, Wo)[:, :Cout]


# ----------------------------- parameters -----------------------------

def init_dense_block(key, *, inplanes, planes):
    k_c1, k_c2, k_bn1, k_bn2 = jax.random.split(key, 4)

    def conv_init(k, c_out, c_in, ks):
        kw, kb = jax.random.split(k)
        fan_in = c_in * ks * ks
        bound = 1.0 / (fan_in ** 0.5)
        w = jax.random.uniform(kw, (c_out, c_in, ks, ks), jnp.float32, -bound, bound)
        b = jax.random.uniform(kb, (c_out,), jnp.float32, -bound, bound)
        return w, b

    def bn_init(k, c):
        kg, kb, km, kv = jax.random.split(k, 4)
        gamma = jax.random.uniform(kg, (c,), jnp.float32, 0.8, 1.2)
        beta = 0.1 * jax.random.normal(kb, (c,), jnp.float32)
        mean = 0.1 * jax.random.normal(km, (c,), jnp.float32)
        var = jax.random.uniform(kv, (c,), jnp.float32, 0.5, 1.5)
        return (gamma, beta, mean, var)

    w1, b1 = conv_init(k_c1, planes, inplanes, 1)
    w2, b2 = conv_init(k_c2, planes, inplanes, 3)
    # TODO(synk): conv3 exists in the PyTorch __init__ but is never used in forward().
    return dict(conv1_w=w1, conv1_b=b1, bn1=bn_init(k_bn1, planes),
                conv2_w=w2, conv2_b=b2, bn2=bn_init(k_bn2, planes))


# ----------------------------- pure-JAX reference -----------------------------

def _reference_forward(params, x):
    def conv_bn_relu(v, w, b, bn, pad):
        u = jax.lax.conv_general_dilated(
            v, w, window_strides=(1, 1), padding=((pad, pad), (pad, pad)),
            dimension_numbers=("NCHW", "OIHW", "NCHW"),
            precision=jax.lax.Precision.HIGHEST)
        u = u + b.reshape(1, -1, 1, 1)
        gamma, beta, mean, var = bn
        s = (gamma / jnp.sqrt(var + BN_EPS)).reshape(1, -1, 1, 1)
        u = (u - mean.reshape(1, -1, 1, 1)) * s + beta.reshape(1, -1, 1, 1)
        return jnp.maximum(u, 0.0)

    y = conv_bn_relu(x, params["conv1_w"], params["conv1_b"], params["bn1"], 0)
    a = x + y
    z = conv_bn_relu(a, params["conv2_w"], params["conv2_b"], params["bn2"], 1)
    a = a + z
    e = conv_bn_relu(a, params["conv2_w"], params["conv2_b"], params["bn2"], 1)
    a = a + e
    out = conv_bn_relu(a, params["conv2_w"], params["conv2_b"], params["bn2"], 1)
    out = jax.lax.reduce_window(out, -jnp.inf, jax.lax.max,
                                (1, 1, 2, 2), (1, 1, 2, 2), "VALID")
    return out


if __name__ == "__main__":
    key = jax.random.PRNGKey(0)
    k_x, k_p = jax.random.split(key)

    B, C, H, W = 2, 4, 16, 16        # inplanes == planes (required by the residual adds)
    x = jax.random.normal(k_x, (B, C, H, W), jnp.float32)
    params = init_dense_block(k_p, inplanes=C, planes=C)

    fwd = jax.jit(dense_block_forward)
    out = jax.block_until_ready(fwd(params, x))

    ref = _reference_forward(params, x)
    assert out.shape == (B, C, H // 2, W // 2)
    assert bool(jnp.all(jnp.isfinite(out)))
    assert bool(jnp.allclose(out, ref, rtol=5e-2, atol=1e-1)), \
        float(jnp.max(jnp.abs(out - ref)))
    print("KERNEL_OK")
</pallas_src>

<mosaic_0001>
module attributes {stable_mosaic.version = 11 : i64} {
  func.func @_dense_block_kernel(%arg0: i32, %arg1: memref<1x8x768xf32, #tpu.memory_space<vmem>>, %arg2: memref<8x8xbf16, #tpu.memory_space<vmem>>, %arg3: memref<8x72xbf16, #tpu.memory_space<vmem>>, %arg4: memref<8x1xf32, #tpu.memory_space<vmem>>, %arg5: memref<8x1xf32, #tpu.memory_space<vmem>>, %arg6: memref<1x768xf32, #tpu.memory_space<vmem>>, %arg7: memref<384x64xbf16, #tpu.memory_space<vmem>>, %arg8: memref<1x8x128xf32, #tpu.memory_space<vmem>>) attributes {dimension_semantics = [#tpu.dimension_semantics<parallel>], iteration_bounds = array<i64: 1>, scalar_prefetch = 0 : i64, scratch_operands = 0 : i64, tpu.core_type = #tpu.core_type<tc>, window_params = [{transform_indices = @transform_0, window_bounds = array<i64: 1, 8, 768>}, {pipeline_mode = #tpu.pipeline_mode<synchronous>, transform_indices = @transform_1, window_bounds = array<i64: 8, 8>}, {pipeline_mode = #tpu.pipeline_mode<synchronous>, transform_indices = @transform_2, window_bounds = array<i64: 8, 72>}, {pipeline_mode = #tpu.pipeline_mode<synchronous>, transform_indices = @transform_3, window_bounds = array<i64: 8, 1>}, {pipeline_mode = #tpu.pipeline_mode<synchronous>, transform_indices = @transform_4, window_bounds = array<i64: 8, 1>}, {pipeline_mode = #tpu.pipeline_mode<synchronous>, transform_indices = @transform_5, window_bounds = array<i64: 1, 768>}, {pipeline_mode = #tpu.pipeline_mode<synchronous>, transform_indices = @transform_6, window_bounds = array<i64: 384, 64>}, {transform_indices = @transform_7, window_bounds = array<i64: 1, 8, 128>}]} {
    %c0 = arith.constant 0 : index
    %c0_0 = arith.constant 0 : index
    %0 = vector.load %arg6[%c0, %c0_0] : memref<1x768xf32, #tpu.memory_space<vmem>>, vector<1x768xf32>
    %c0_1 = arith.constant 0 : index
    %c0_2 = arith.constant 0 : index
    %1 = vector.load %arg4[%c0_1, %c0_2] : memref<8x1xf32, #tpu.memory_space<vmem>>, vector<8x1xf32>
    %c0_3 = arith.constant 0 : index
    %c0_4 = arith.constant 0 : index
    %2 = vector.load %arg5[%c0_3, %c0_4] : memref<8x1xf32, #tpu.memory_space<vmem>>, vector<8x1xf32>
    %c0_5 = arith.constant 0 : index
    %c0_6 = arith.constant 0 : index
    %3 = vector.load %arg2[%c0_5, %c0_6] : memref<8x8xbf16, #tpu.memory_space<vmem>>, vector<8x8xbf16>
    %c0_7 = arith.constant 0 : index
    %c0_8 = arith.constant 0 : index
    %4 = vector.load %arg3[%c0_7, %c0_8] : memref<8x72xbf16, #tpu.memory_space<vmem>>, vector<8x72xbf16>
    %c0_9 = arith.constant 0 : index
    %c0_10 = arith.constant 0 : index
    %c0_11 = arith.constant 0 : index
    %5 = vector.load %arg1[%c0_9, %c0_10, %c0_11] : memref<1x8x768xf32, #tpu.memory_space<vmem>>, vector<1x8x768xf32>
    %6 = vector.shape_cast %5 : vector<1x8x768xf32> to vector<8x768xf32>
    %7 = arith.truncf %6 : vector<8x768xf32> to vector<8x768xbf16>
    %cst = arith.constant dense<0.000000e+00> : vector<8x768xf32>
    %8 = tpu.matmul %3, %7, %cst {dimension_numbers = #tpu.dot_dimension_numbers<[1], [0], [0], [1], [0, 0, 1, 1], [], []>} : vector<8x8xbf16>, vector<8x768xbf16>, vector<8x768xf32> -> vector<8x768xf32>
    %9 = vector.broadcast %1 : vector<8x1xf32> to vector<8x768xf32>
    %10 = arith.addf %8, %9 : vector<8x768xf32>
    %cst_12 = arith.constant 0.000000e+00 : f32
    %11 = vector.broadcast %cst_12 : f32 to vector<8x768xf32>
    %12 = arith.maximumf %10, %11 : vector<8x768xf32>
    %13 = vector.broadcast %0 : vector<1x768xf32> to vector<8x768xf32>
    %14 = arith.mulf %13, %12 : vector<8x768xf32>
    %15 = arith.addf %6, %14 : vector<8x768xf32>
    %c19_i32 = arith.constant 19 : i32
    %16 = tpu.dynamic_rotate %15 by %c19_i32 dim 1 : vector<8x768xf32>, i32 -> vector<8x768xf32>
    %c18_i32 = arith.constant 18 : i32
    %17 = tpu.dynamic_rotate %15 by %c18_i32 dim 1 : vector<8x768xf32>, i32 -> vector<8x768xf32>
    %c17_i32 = arith.constant 17 : i32
    %18 = tpu.dynamic_rotate %15 by %c17_i32 dim 1 : vector<8x768xf32>, i32 -> vector<8x768xf32>
    %c1_i32 = arith.constant 1 : i32
    %19 = tpu.dynamic_rotate %15 by %c1_i32 dim 1 : vector<8x768xf32>, i32 -> vector<8x768xf32>
    %c767_i32 = arith.constant 767 : i32
    %20 = tpu.dynamic_rotate %15 by %c767_i32 dim 1 : vector<8x768xf32>, i32 -> vector<8x768xf32>
    %c751_i32 = arith.constant 751 : i32
    %21 = tpu.dynamic_rotate %15 by %c751_i32 dim 1 : vector<8x768xf32>, i32 -> vector<8x768xf32>
    %c750_i32 = arith.constant 750 : i32
    %22 = tpu.dynamic_rotate %15 by %c750_i32 dim 1 : vector<8x768xf32>, i32 -> vector<8x768xf32>
    %c749_i32 = arith.constant 749 : i32
    %23 = tpu.dynamic_rotate %15 by %c749_i32 dim 1 : vector<8x768xf32>, i32 -> vector<8x768xf32>
    %24 = tpu.concatenate %16, %17, %18, %19, %15, %20, %21, %22, %23 in 0 : vector<8x768xf32>, vector<8x768xf32>, vector<8x768xf32>, vector<8x768xf32>, vector<8x768xf32>, vector<8x768xf32>, vector<8x768xf32>, vector<8x768xf32>, vector<8x768xf32> -> vector<72x768xf32>
    %25 = arith.truncf %24 : vector<72x768xf32> to vector<72x768xbf16>
    %cst_13 = arith.constant dense<0.000000e+00> : vector<8x768xf32>
    %26 = tpu.matmul %4, %25, %cst_13 {dimension_numbers = #tpu.dot_dimension_numbers<[1], [0], [0], [1], [0, 0, 1, 1], [], []>} : vector<8x72xbf16>, vector<72x768xbf16>, vector<8x768xf32> -> vector<8x768xf32>
    %27 = vector.broadcast %2 : vector<8x1xf32> to vector<8x768xf32>
    %28 = arith.addf %26, %27 : vector<8x768xf32>
    %cst_14 = arith.constant 0.000000e+00 : f32
    %29 = vector.broadcast %cst_14 : f32 to vector<8x768xf32>
    %30 = arith.maximumf %28, %29 : vector<8x768xf32>
    %31 = vector.broadcast %0 : vector<1x768xf32> to vector<8x768xf32>
    %32 = arith.mulf %31, %30 : vector<8x768xf32>
    %33 = arith.addf %15, %32 : vector<8x768xf32>
    %c19_i32_15 = arith.constant 19 : i32
    %34 = tpu.dynamic_rotate %33 by %c19_i32_15 dim 1 : vector<8x768xf32>, i32 -> vector<8x768xf32>
    %c18_i32_16 = arith.constant 18 : i32
    %35 = tpu.dynamic_rotate %33 by %c18_i32_16 dim 1 : vector<8x768xf32>, i32 -> vector<8x768xf32>
    %c17_i32_17 = arith.constant 17 : i32
    %36 = tpu.dynamic_rotate %33 by %c17_i32_17 dim 1 : vector<8x768xf32>, i32 -> vector<8x768xf32>
    %c1_i32_18 = arith.constant 1 : i32
    %37 = tpu.dynamic_rotate %33 by %c1_i32_18 dim 1 : vector<8x768xf32>, i32 -> vector<8x768xf32>
    %c767_i32_19 = arith.constant 767 : i32
    %38 = tpu.dynamic_rotate %33 by %c767_i32_19 dim 1 : vector<8x768xf32>, i32 -> vector<8x768xf32>
    %c751_i32_20 = arith.constant 751 : i32
    %39 = tpu.dynamic_rotate %33 by %c751_i32_20 dim 1 : vector<8x768xf32>, i32 -> vector<8x768xf32>
    %c750_i32_21 = arith.constant 750 : i32
    %40 = tpu.dynamic_rotate %33 by %c750_i32_21 dim 1 : vector<8x768xf32>, i32 -> vector<8x768xf32>
    %c749_i32_22 = arith.constant 749 : i32
    %41 = tpu.dynamic_rotate %33 by %c749_i32_22 dim 1 : vector<8x768xf32>, i32 -> vector<8x768xf32>
    %42 = tpu.concatenate %34, %35, %36, %37, %33, %38, %39, %40, %41 in 0 : vector<8x768xf32>, vector<8x768xf32>, vector<8x768xf32>, vector<8x768xf32>, vector<8x768xf32>, vector<8x768xf32>, vector<8x768xf32>, vector<8x768xf32>, vector<8x768xf32> -> vector<72x768xf32>
    %43 = arith.truncf %42 : vector<72x768xf32> to vector<72x768xbf16>
    %cst_23 = arith.constant dense<0.000000e+00> : vector<8x768xf32>
    %44 = tpu.matmul %4, %43, %cst_23 {dimension_numbers = #tpu.dot_dimension_numbers<[1], [0], [0], [1], [0, 0, 1, 1], [], []>} : vector<8x72xbf16>, vector<72x768xbf16>, vector<8x768xf32> -> vector<8x768xf32>
    %45 = vector.broadcast %2 : vector<8x1xf32> to vector<8x768xf32>
    %46 = arith.addf %44, %45 : vector<8x768xf32>
    %cst_24 = arith.constant 0.000000e+00 : f32
    %47 = vector.broadcast %cst_24 : f32 to vector<8x768xf32>
    %48 = arith.maximumf %46, %47 : vector<8x768xf32>
    %49 = vector.broadcast %0 : vector<1x768xf32> to vector<8x768xf32>
    %50 = arith.mulf %49, %48 : vector<8x768xf32>
    %51 = arith.addf %33, %50 : vector<8x768xf32>
    %c19_i32_25 = arith.constant 19 : i32
    %52 = tpu.dynamic_rotate %51 by %c19_i32_25 dim 1 : vector<8x768xf32>, i32 -> vector<8x768xf32>
    %c18_i32_26 = arith.constant 18 : i32
    %53 = tpu.dynamic_rotate %51 by %c18_i32_26 dim 1 : vector<8x768xf32>, i32 -> vector<8x768xf32>
    %c17_i32_27 = arith.constant 17 : i32
    %54 = tpu.dynamic_rotate %51 by %c17_i32_27 dim 1 : vector<8x768xf32>, i32 -> vector<8x768xf32>
    %c1_i32_28 = arith.constant 1 : i32
    %55 = tpu.dynamic_rotate %51 by %c1_i32_28 dim 1 : vector<8x768xf32>, i32 -> vector<8x768xf32>
    %c767_i32_29 = arith.constant 767 : i32
    %56 = tpu.dynamic_rotate %51 by %c767_i32_29 dim 1 : vector<8x768xf32>, i32 -> vector<8x768xf32>
    %c751_i32_30 = arith.constant 751 : i32
    %57 = tpu.dynamic_rotate %51 by %c751_i32_30 dim 1 : vector<8x768xf32>, i32 -> vector<8x768xf32>
    %c750_i32_31 = arith.constant 750 : i32
    %58 = tpu.dynamic_rotate %51 by %c750_i32_31 dim 1 : vector<8x768xf32>, i32 -> vector<8x768xf32>
    %c749_i32_32 = arith.constant 749 : i32
    %59 = tpu.dynamic_rotate %51 by %c749_i32_32 dim 1 : vector<8x768xf32>, i32 -> vector<8x768xf32>
    %60 = tpu.concatenate %52, %53, %54, %55, %51, %56, %57, %58, %59 in 0 : vector<8x768xf32>, vector<8x768xf32>, vector<8x768xf32>, vector<8x768xf32>, vector<8x768xf32>, vector<8x768xf32>, vector<8x768xf32>, vector<8x768xf32>, vector<8x768xf32> -> vector<72x768xf32>
    %61 = arith.truncf %60 : vector<72x768xf32> to vector<72x768xbf16>
    %cst_33 = arith.constant dense<0.000000e+00> : vector<8x768xf32>
    %62 = tpu.matmul %4, %61, %cst_33 {dimension_numbers = #tpu.dot_dimension_numbers<[1], [0], [0], [1], [0, 0, 1, 1], [], []>} : vector<8x72xbf16>, vector<72x768xbf16>, vector<8x768xf32> -> vector<8x768xf32>
    %63 = vector.broadcast %2 : vector<8x1xf32> to vector<8x768xf32>
    %64 = arith.addf %62, %63 : vector<8x768xf32>
    %cst_34 = arith.constant 0.000000e+00 : f32
    %65 = vector.broadcast %cst_34 : f32 to vector<8x768xf32>
    %66 = arith.maximumf %64, %65 : vector<8x768xf32>
    %c767_i32_35 = arith.constant 767 : i32
    %67 = tpu.dynamic_rotate %66 by %c767_i32_35 dim 1 : vector<8x768xf32>, i32 -> vector<8x768xf32>
    %68 = arith.maximumf %66, %67 : vector<8x768xf32>
    %c750_i32_36 = arith.constant 750 : i32
    %69 = tpu.dynamic_rotate %68 by %c750_i32_36 dim 1 : vector<8x768xf32>, i32 -> vector<8x768xf32>
    %70 = arith.maximumf %68, %69 : vector<8x768xf32>
    %71 = arith.truncf %70 : vector<8x768xf32> to vector<8x768xbf16>
    %c0_37 = arith.constant 0 : index
    %c0_38 = arith.constant 0 : index
    %72 = vector.load %arg7[%c0_37, %c0_38] : memref<384x64xbf16, #tpu.memory_space<vmem>>, vector<384x64xbf16>
    %73 = vector.extract_strided_slice %71 {offsets = [0, 0], sizes = [8, 384], strides = [1, 1]} : vector<8x768xbf16> to vector<8x384xbf16>
    %cst_39 = arith.constant dense<0.000000e+00> : vector<8x64xf32>
    %74 = tpu.matmul %73, %72, %cst_39 {dimension_numbers = #tpu.dot_dimension_numbers<[1], [0], [0], [1], [0, 0, 1, 1], [], []>} : vector<8x384xbf16>, vector<384x64xbf16>, vector<8x64xf32> -> vector<8x64xf32>
    %75 = vector.extract_strided_slice %71 {offsets = [0, 384], sizes = [8, 384], strides = [1, 1]} : vector<8x768xbf16> to vector<8x384xbf16>
    %cst_40 = arith.constant dense<0.000000e+00> : vector<8x64xf32>
    %76 = tpu.matmul %75, %72, %cst_40 {dimension_numbers = #tpu.dot_dimension_numbers<[1], [0], [0], [1], [0, 0, 1, 1], [], []>} : vector<8x384xbf16>, vector<384x64xbf16>, vector<8x64xf32> -> vector<8x64xf32>
    %77 = tpu.concatenate %74, %76 in 1 : vector<8x64xf32>, vector<8x64xf32> -> vector<8x128xf32>
    %c0_41 = arith.constant 0 : index
    %c0_42 = arith.constant 0 : index
    %c0_43 = arith.constant 0 : index
    %78 = vector.load %arg8[%c0_41, %c0_42, %c0_43] : memref<1x8x128xf32, #tpu.memory_space<vmem>>, vector<1x8x128xf32>
    %79 = vector.shape_cast %78 : vector<1x8x128xf32> to vector<8x128xf32>
    %80 = vector.shape_cast %77 : vector<8x128xf32> to vector<1x8x128xf32>
    tpu.vector_store %arg8[%c0_41, %c0_42, %c0_43], %80 {strides = array<i32>} : memref<1x8x128xf32, #tpu.memory_space<vmem>>, vector<1x8x128xf32>,
    return
  }
  func.func @transform_0(%arg0: i32) -> (i32, i32, i32) {
    %c0_i32 = arith.constant 0 : i32
    %c0_i32_0 = arith.constant 0 : i32
    %c0_i32_1 = arith.constant 0 : i32
    return %arg0, %c0_i32, %c0_i32_0 : i32, i32, i32
  }
  func.func @transform_1(%arg0: i32) -> (i32, i32) {
    %c0_i32 = arith.constant 0 : i32
    %c0_i32_0 = arith.constant 0 : i32
    %c0_i32_1 = arith.constant 0 : i32
    return %c0_i32, %c0_i32_0 : i32, i32
  }
  func.func @transform_2(%arg0: i32) -> (i32, i32) {
    %c0_i32 = arith.constant 0 : i32
    %c0_i32_0 = arith.constant 0 : i32
    %c0_i32_1 = arith.constant 0 : i32
    return %c0_i32, %c0_i32_0 : i32, i32
  }
  func.func @transform_3(%arg0: i32) -> (i32, i32) {
    %c0_i32 = arith.constant 0 : i32
    %c0_i32_0 = arith.constant 0 : i32
    %c0_i32_1 = arith.constant 0 : i32
    return %c0_i32, %c0_i32_0 : i32, i32
  }
  func.func @transform_4(%arg0: i32) -> (i32, i32) {
    %c0_i32 = arith.constant 0 : i32
    %c0_i32_0 = arith.constant 0 : i32
    %c0_i32_1 = arith.constant 0 : i32
    return %c0_i32, %c0_i32_0 : i32, i32
  }
  func.func @transform_5(%arg0: i32) -> (i32, i32) {
    %c0_i32 = arith.constant 0 : i32
    %c0_i32_0 = arith.constant 0 : i32
    %c0_i32_1 = arith.constant 0 : i32
    return %c0_i32, %c0_i32_0 : i32, i32
  }
  func.func @transform_6(%arg0: i32) -> (i32, i32) {
    %c0_i32 = arith.constant 0 : i32
    %c0_i32_0 = arith.constant 0 : i32
    %c0_i32_1 = arith.constant 0 : i32
    return %c0_i32, %c0_i32_0 : i32, i32
  }
  func.func @transform_7(%arg0: i32) -> (i32, i32, i32) {
    %c0_i32 = arith.constant 0 : i32
    %c0_i32_0 = arith.constant 0 : i32
    %c0_i32_1 = arith.constant 0 : i32
    return %arg0, %c0_i32, %c0_i32_0 : i32, i32, i32
  }
}

</mosaic_0001>

<llo_original>
// kernel: dense_block_forward.1
$region0: #{dense_block_forward.1}
  #allocation0 [shape = 'u32[]', space=smem, size = 0x4, offset = 0x4, fixed_abs, tag = 'smem constant byte address 0x4 - core index']
  #allocation1 [shape = 'u32[72,128]{1,0:T(1,128)}', space=vmem, size = 0x9000, scoped, tag = 'internal scratch']
  %s0 = inlined_call_operand.vmem [shape: f32[1,8,768], index: 0, kind: input, shape index: {}]
  %s1 = inlined_call_operand.vmem [shape: bf16[8,8], index: 1, kind: input, shape index: {}]
  %s2 = inlined_call_operand.vmem [shape: bf16[8,72], index: 2, kind: input, shape index: {}]
  %s3 = inlined_call_operand.vmem [shape: f32[8,1], index: 3, kind: input, shape index: {}]
  %s4 = inlined_call_operand.vmem [shape: f32[8,1], index: 4, kind: input, shape index: {}]
  %s5 = inlined_call_operand.vmem [shape: f32[1,768], index: 5, kind: input, shape index: {}]
  %s6 = inlined_call_operand.vmem [shape: bf16[384,64], index: 6, kind: input, shape index: {}]
  %s7 = inlined_call_operand.vmem [shape: f32[1,8,128], index: 7, kind: output, shape index: {}]
  %s8 = sld [smem:[#allocation0]]
  $region38: #{dense_block_forward.1} parent=0
    _
  %s10 = ssub.s32 1, %s8
  %s11 = scalar_select 0, %s10, %s8
  // Predicated region
  $region2: #{dense_block_forward.1} parent=0 // pred_check
    _
  $region3: #{dense_block_forward.1} parent=0 // pred_check_branch
    %13 = sbr.rel (0) target = $region5
  $region4: #{dense_block_forward.1} parent=0 // pred_region
    _
  $region5: #{dense_block_forward.1} parent=0 // pred_fallthru
    _
  // Predicated region
  $region6: #{dense_block_forward.1} parent=0 // pred_check
    _
  $region7: #{dense_block_forward.1} parent=0 // pred_check_branch
    %15 = sbr.rel (0) target = $region9
  $region8: #{dense_block_forward.1} parent=0 // pred_region
    _
  $region9: #{dense_block_forward.1} parent=0 // pred_fallthru
    _
  // Predicated region
  $region10: #{dense_block_forward.1} parent=0 // pred_check
    _
  $region11: #{dense_block_forward.1} parent=0 // pred_check_branch
    %17 = sbr.rel (0) target = $region13
  $region12: #{dense_block_forward.1} parent=0 // pred_region
    _
  $region13: #{dense_block_forward.1} parent=0 // pred_fallthru
    _
  // Predicated region
  $region14: #{dense_block_forward.1} parent=0 // pred_check
    _
  $region15: #{dense_block_forward.1} parent=0 // pred_check_branch
    %19 = sbr.rel (0) target = $region17
  $region16: #{dense_block_forward.1} parent=0 // pred_region
    _
  $region17: #{dense_block_forward.1} parent=0 // pred_fallthru
    _
  // Predicated region
  $region18: #{dense_block_forward.1} parent=0 // pred_check
    _
  $region19: #{dense_block_forward.1} parent=0 // pred_check_branch
    %21 = sbr.rel (0) target = $region21
  $region20: #{dense_block_forward.1} parent=0 // pred_region
    _
  $region21: #{dense_block_forward.1} parent=0 // pred_fallthru
    _
  // Predicated region
  $region22: #{dense_block_forward.1} parent=0 // pred_check
    _
  $region23: #{dense_block_forward.1} parent=0 // pred_check_branch
    %23 = sbr.rel (0) target = $region25
  $region24: #{dense_block_forward.1} parent=0 // pred_region
    _
  $region25: #{dense_block_forward.1} parent=0 // pred_fallthru
    _
  // Predicated region
  $region26: #{dense_block_forward.1} parent=0 // pred_check
    _
  $region27: #{dense_block_forward.1} parent=0 // pred_check_branch
    %25 = sbr.rel (0) target = $region29
  $region28: #{dense_block_forward.1} parent=0 // pred_region
    _
  $region29: #{dense_block_forward.1} parent=0 // pred_fallthru
    _
  %v27 = vld [vmem:[%s5] sm:$0x3f]
  %v28 = vld [vmem:[%s3] sm:$0xff]
  %v29 = vld [vmem:[%s4] sm:$0xff]
  %v30 = vld [vmem:[%s1] sm:$0xf]
  %v31 = vld [vmem:[%s2] sm:$0xf]
  %v32 = vld [vmem:[%s0] sm:$0xff]
  %v33 = vld [vmem:[%s0 + $0x8] sm:$0xff]
  %v34 = vld [vmem:[%s0 + $0x10] sm:$0xff]
  %v35 = vld [vmem:[%s0 + $0x18] sm:$0xff]
  %v36 = vld [vmem:[%s0 + $0x20] sm:$0xff]
  %v37 = vld [vmem:[%s0 + $0x28] sm:$0xff]
  %v38 = vpack.c.bf16 %v32, %v32
  %v39 = vpack.c.bf16 %v33, %v33
  %v40 = vpack.c.bf16 %v34, %v34
  %v41 = vpack.c.bf16 %v35, %v35
  %v42 = vpack.c.bf16 %v36, %v36
  %v43 = vpack.c.bf16 %v37, %v37
  %45 = vset.pattern.permute.xlu0 0
  %46 = vperm.xlu0 %45, %v28
  %v47 = vpop.permute.xlu0 %46
  %vm49 = vcmask 64512
  %v51 = vsel %vm49, %v30, 0
  %vm53 = vcmask 1043456
  %v55 = vsel %vm53, %v38, 0
  %v58 = vsel %vm53, %v39, 0
  %v61 = vsel %vm53, %v40, 0
  %v64 = vsel %vm53, %v41, 0
  %v67 = vsel %vm53, %v42, 0
  %v70 = vsel %vm53, %v43, 0
  %72 = vmatpush.bf16.msra.mxu0 0
  %73 = vmatpush.bf16.msra.mxu0 0
  %74 = vmatpush.bf16.msra.mxu0 0
  %75 = vmatpush.bf16.msra.mxu0 0
  %76 = vmatpush.bf16.msra.mxu0 0
  %77 = vmatpush.bf16.msra.mxu0 0
  %78 = vmatpush.bf16.msra.mxu0 0
  %79 = vmatpush.bf16.msra.mxu0 %v55
  %80 = vmatmul.bf16.gmra.mxu0 %v51
  %v81 = vpop.f32.mrf.mxu0
  %v82 = vadd.f32 %v47, %v81
  %v83 = vpop.f32.mrf.mxu0
  %84 = vdwg.mxu0
  %85 = vmatpush.bf16.msra.mxu0 0
  %86 = vmatpush.bf16.msra.mxu0 0
  %87 = vmatpush.bf16.msra.mxu0 0
  %88 = vmatpush.bf16.msra.mxu0 0
  %89 = vmatpush.bf16.msra.mxu0 0
  %90 = vmatpush.bf16.msra.mxu0 0
  %91 = vmatpush.bf16.msra.mxu0 0
  %92 = vmatpush.bf16.msra.mxu0 %v58
  %93 = vmatmul.bf16.gmra.mxu0 %v51
  %v94 = vpop.f32.mrf.mxu0
  %v95 = vadd.f32 %v47, %v94
  %v96 = vpop.f32.mrf.mxu0
  %97 = vdwg.mxu0
  %98 = vmatpush.bf16.msra.mxu0 0
  %99 = vmatpush.bf16.msra.mxu0 0
  %100 = vmatpush.bf16.msra.mxu0 0
  %101 = vmatpush.bf16.msra.mxu0 0
  %102 = vmatpush.bf16.msra.mxu0 0
  %103 = vmatpush.bf16.msra.mxu0 0
  %104 = vmatpush.bf16.msra.mxu0 0
  %105 = vmatpush.bf16.msra.mxu0 %v61
  %106 = vmatmul.bf16.gmra.mxu0 %v51
  %v107 = vpop.f32.mrf.mxu0
  %v108 = vadd.f32 %v47, %v107
  %v109 = vpop.f32.mrf.mxu0
  %110 = vdwg.mxu0
  %111 = vmatpush.bf16.msra.mxu0 0
  %112 = vmatpush.bf16.msra.mxu0 0
  %113 = vmatpush.bf16.msra.mxu0 0
  %114 = vmatpush.bf16.msra.mxu0 0
  %115 = vmatpush.bf16.msra.mxu0 0
  %116 = vmatpush.bf16.msra.mxu0 0
  %117 = vmatpush.bf16.msra.mxu0 0
  %118 = vmatpush.bf16.msra.mxu0 %v64
  %119 = vmatmul.bf16.gmra.mxu0 %v51
  %v120 = vpop.f32.mrf.mxu0
  %v121 = vadd.f32 %v47, %v120
  %v122 = vpop.f32.mrf.mxu0
  %123 = vdwg.mxu0
  %124 = vmatpush.bf16.msra.mxu0 0
  %125 = vmatpush.bf16.msra.mxu0 0
  %126 = vmatpush.bf16.msra.mxu0 0
  %127 = vmatpush.bf16.msra.mxu0 0
  %128 = vmatpush.bf16.msra.mxu0 0
  %129 = vmatpush.bf16.msra.mxu0 0
  %130 = vmatpush.bf16.msra.mxu0 0
  %131 = vmatpush.bf16.msra.mxu0 %v67
  %132 = vmatmul.bf16.gmra.mxu0 %v51
  %v133 = vpop.f32.mrf.mxu0
  %v134 = vadd.f32 %v47, %v133
  %v135 = vpop.f32.mrf.mxu0
  %136 = vdwg.mxu0
  %137 = vmatpush.bf16.msra.mxu0 0
  %138 = vmatpush.bf16.msra.mxu0 0
  %139 = vmatpush.bf16.msra.mxu0 0
  %140 = vmatpush.bf16.msra.mxu0 0
  %141 = vmatpush.bf16.msra.mxu0 0
  %142 = vmatpush.bf16.msra.mxu0 0
  %143 = vmatpush.bf16.msra.mxu0 0
  %144 = vmatpush.bf16.msra.mxu0 %v70
  %145 = vmatmul.bf16.gmra.mxu0 %v51
  %v146 = vpop.f32.mrf.mxu0
  %v147 = vadd.f32 %v47, %v146
  %v148 = vpop.f32.mrf.mxu0
  %149 = vdwg.mxu0
  %v150 = vmax.f32 %v82, 0.0
  %v151 = vmax.f32 %v95, 0.0
  %v152 = vmax.f32 %v108, 0.0
  %v153 = vmax.f32 %v121, 0.0
  %v154 = vmax.f32 %v134, 0.0
  %v155 = vmax.f32 %v147, 0.0
  %v157 = vperm.slane %v27, 0
  %v158 = vperm.slane %v27, 1
  %v159 = vperm.slane %v27, 2
  %v160 = vperm.slane %v27, 3
  %v161 = vperm.slane %v27, 4
  %v162 = vperm.slane %v27, 5
  %v169 = vmul.f32 %v157, %v150
  %v170 = vmul.f32 %v158, %v151
  %v171 = vmul.f32 %v159, %v152
  %v172 = vmul.f32 %v160, %v153
  %v173 = vmul.f32 %v161, %v154
  %v174 = vmul.f32 %v162, %v155
  %v175 = vadd.f32 %v32, %v169
  %v176 = vadd.f32 %v33, %v170
  %v177 = vadd.f32 %v34, %v171
  %v178 = vadd.f32 %v35, %v172
  %v179 = vadd.f32 %v36, %v173
  %v180 = vadd.f32 %v37, %v174
  %181 = vrot.lane.b32.xlu0 %v175, 19
  %v182 = vpop.permute.xlu0 %181
  %183 = vrot.lane.b32.xlu0 %v176, 19
  %v184 = vpop.permute.xlu0 %183
  %185 = vrot.lane.b32.xlu0 %v177, 19
  %v186 = vpop.permute.xlu0 %185
  %187 = vrot.lane.b32.xlu0 %v178, 19
  %v188 = vpop.permute.xlu0 %187
  %189 = vrot.lane.b32.xlu0 %v179, 19
  %v190 = vpop.permute.xlu0 %189
  %191 = vrot.lane.b32.xlu0 %v180, 19
  %v192 = vpop.permute.xlu0 %191
  %v193 = vlaneseq
  %v194 = vand.u32 %v193, 127
  %vm195 = vcmp.lt.s32.totalorder %v194, 19
  %v196 = vsel %vm195, %v190, %v192
  %v197 = vsel %vm195, %v188, %v190
  %v198 = vsel %vm195, %v186, %v188
  %v199 = vsel %vm195, %v184, %v186
  %v200 = vsel %vm195, %v182, %v184
  %v201 = vsel %vm195, %v192, %v182
  %202 = vrot.lane.b32.xlu0 %v175, 18
  %v203 = vpop.permute.xlu0 %202
  %204 = vrot.lane.b32.xlu0 %v176, 18
  %v205 = vpop.permute.xlu0 %204
  %206 = vrot.lane.b32.xlu0 %v177, 18
  %v207 = vpop.permute.xlu0 %206
  %208 = vrot.lane.b32.xlu0 %v178, 18
  %v209 = vpop.permute.xlu0 %208
  %210 = vrot.lane.b32.xlu0 %v179, 18
  %v211 = vpop.permute.xlu0 %210
  %212 = vrot.lane.b32.xlu0 %v180, 18
  %v213 = vpop.permute.xlu0 %212
  %vm214 = vcmp.lt.s32.totalorder %v194, 18
  %v215 = vsel %vm214, %v211, %v213
  %v216 = vsel %vm214, %v209, %v211
  %v217 = vsel %vm214, %v207, %v209
  %v218 = vsel %vm214, %v205, %v207
  %v219 = vsel %vm214, %v203, %v205
  %v220 = vsel %vm214, %v213, %v203
  %221 = vrot.lane.b32.xlu0 %v175, 17
  %v222 = vpop.permute.xlu0 %221
  %223 = vrot.lane.b32.xlu0 %v176, 17
  %v224 = vpop.permute.xlu0 %223
  %225 = vrot.lane.b32.xlu0 %v177, 17
  %v226 = vpop.permute.xlu0 %225
  %227 = vrot.lane.b32.xlu0 %v178, 17
  %v228 = vpop.permute.xlu0 %227
  %229 = vrot.lane.b32.xlu0 %v179, 17
  %v230 = vpop.permute.xlu0 %229
  %231 = vrot.lane.b32.xlu0 %v180, 17
  %v232 = vpop.permute.xlu0 %231
  %vm233 = vcmp.lt.s32.totalorder %v194, 17
  %v234 = vsel %vm233, %v230, %v232
  %v235 = vsel %vm233, %v228, %v230
  %v236 = vsel %vm233, %v226, %v228
  %v237 = vsel %vm233, %v224, %v226
  %v238 = vsel %vm233, %v222, %v224
  %v239 = vsel %vm233, %v232, %v222
  %240 = vrot.lane.b32.xlu0 %v175, 1
  %v241 = vpop.permute.xlu0 %240
  %242 = vrot.lane.b32.xlu0 %v176, 1
  %v243 = vpop.permute.xlu0 %242
  %244 = vrot.lane.b32.xlu0 %v177, 1
  %v245 = vpop.permute.xlu0 %244
  %246 = vrot.lane.b32.xlu0 %v178, 1
  %v247 = vpop.permute.xlu0 %246
  %248 = vrot.lane.b32.xlu0 %v179, 1
  %v249 = vpop.permute.xlu0 %248
  %250 = vrot.lane.b32.xlu0 %v180, 1
  %v251 = vpop.permute.xlu0 %250
  %vm252 = vcmp.lt.s32.totalorder %v194, 1
  %v253 = vsel %vm252, %v249, %v251
  %v254 = vsel %vm252, %v247, %v249
  %v255 = vsel %vm252, %v245, %v247
  %v256 = vsel %vm252, %v243, %v245
  %v257 = vsel %vm252, %v241, %v243
  %v258 = vsel %vm252, %v251, %v241
  %259 = vrot.lane.b32.xlu0 %v175, 127
  %v260 = vpop.permute.xlu0 %259
  %261 = vrot.lane.b32.xlu0 %v176, 127
  %v262 = vpop.permute.xlu0 %261
  %263 = vrot.lane.b32.xlu0 %v177, 127
  %v264 = vpop.permute.xlu0 %263
  %265 = vrot.lane.b32.xlu0 %v178, 127
  %v266 = vpop.permute.xlu0 %265
  %267 = vrot.lane.b32.xlu0 %v179, 127
  %v268 = vpop.permute.xlu0 %267
  %269 = vrot.lane.b32.xlu0 %v180, 127
  %v270 = vpop.permute.xlu0 %269
  %vm271 = vcmp.lt.s32.totalorder %v194, 127
  %v272 = vsel %vm271, %v268, %v270
  %v273 = vsel %vm271, %v266, %v268
  %v274 = vsel %vm271, %v264, %v266
  %v275 = vsel %vm271, %v262, %v264
  %v276 = vsel %vm271, %v260, %v262
  %v277 = vsel %vm271, %v270, %v260
  %278 = vrot.lane.b32.xlu0 %v175, 111
  %v279 = vpop.permute.xlu0 %278
  %280 = vrot.lane.b32.xlu0 %v176, 111
  %v281 = vpop.permute.xlu0 %280
  %282 = vrot.lane.b32.xlu0 %v177, 111
  %v283 = vpop.permute.xlu0 %282
  %284 = vrot.lane.b32.xlu0 %v178, 111
  %v285 = vpop.permute.xlu0 %284
  %286 = vrot.lane.b32.xlu0 %v179, 111
  %v287 = vpop.permute.xlu0 %286
  %288 = vrot.lane.b32.xlu0 %v180, 111
  %v289 = vpop.permute.xlu0 %288
  %vm290 = vcmp.lt.s32.totalorder %v194, 111
  %v291 = vsel %vm290, %v287, %v289
  %v292 = vsel %vm290, %v285, %v287
  %v293 = vsel %vm290, %v283, %v285
  %v294 = vsel %vm290, %v281, %v283
  %v295 = vsel %vm290, %v279, %v281
  %v296 = vsel %vm290, %v289, %v279
  %297 = vrot.lane.b32.xlu0 %v175, 110
  %v298 = vpop.permute.xlu0 %297
  %299 = vrot.lane.b32.xlu0 %v176, 110
  %v300 = vpop.permute.xlu0 %299
  %301 = vrot.lane.b32.xlu0 %v177, 110
  %v302 = vpop.permute.xlu0 %301
  %303 = vrot.lane.b32.xlu0 %v178, 110
  %v304 = vpop.permute.xlu0 %303
  %305 = vrot.lane.b32.xlu0 %v179, 110
  %v306 = vpop.permute.xlu0 %305
  %307 = vrot.lane.b32.xlu0 %v180, 110
  %v308 = vpop.permute.xlu0 %307
  %vm309 = vcmp.lt.s32.totalorder %v194, 110
  %v310 = vsel %vm309, %v306, %v308
  %v311 = vsel %vm309, %v304, %v306
  %v312 = vsel %vm309, %v302, %v304
  %v313 = vsel %vm309, %v300, %v302
  %v314 = vsel %vm309, %v298, %v300
  %v315 = vsel %vm309, %v308, %v298
  %316 = vrot.lane.b32.xlu0 %v175, 109
  %v317 = vpop.permute.xlu0 %316
  %318 = vrot.lane.b32.xlu0 %v176, 109
  %v319 = vpop.permute.xlu0 %318
  %320 = vrot.lane.b32.xlu0 %v177, 109
  %v321 = vpop.permute.xlu0 %320
  %322 = vrot.lane.b32.xlu0 %v178, 109
  %v323 = vpop.permute.xlu0 %322
  %324 = vrot.lane.b32.xlu0 %v179, 109
  %v325 = vpop.permute.xlu0 %324
  %326 = vrot.lane.b32.xlu0 %v180, 109
  %v327 = vpop.permute.xlu0 %326
  %vm328 = vcmp.lt.s32.totalorder %v194, 109
  %v329 = vsel %vm328, %v325, %v327
  %v330 = vsel %vm328, %v323, %v325
  %v331 = vsel %vm328, %v321, %v323
  %v332 = vsel %vm328, %v319, %v321
  %v333 = vsel %vm328, %v317, %v319
  %v334 = vsel %vm328, %v327, %v317
  %v335 = vpack.c.bf16 %v220, %v201
  %v336 = vpack.c.bf16 %v219, %v200
  %v337 = vpack.c.bf16 %v218, %v199
  %v338 = vpack.c.bf16 %v217, %v198
  %v339 = vpack.c.bf16 %v216, %v197
  %v340 = vpack.c.bf16 %v215, %v196
  %v341 = vpack.c.bf16 %v258, %v239
  %v342 = vpack.c.bf16 %v257, %v238
  %v343 = vpack.c.bf16 %v256, %v237
  %v344 = vpack.c.bf16 %v255, %v236
  %v345 = vpack.c.bf16 %v254, %v235
  %v346 = vpack.c.bf16 %v253, %v234
  %v347 = vpack.c.bf16 %v276, %v175
  %v348 = vpack.c.bf16 %v275, %v176
  %v349 = vpack.c.bf16 %v274, %v177
  %v350 = vpack.c.bf16 %v273, %v178
  %v351 = vpack.c.bf16 %v272, %v179
  %v352 = vpack.c.bf16 %v277, %v180
  %v353 = vpack.c.bf16 %v314, %v295
  %v354 = vpack.c.bf16 %v313, %v294
  %v355 = vpack.c.bf16 %v312, %v293
  %v356 = vpack.c.bf16 %v311, %v292
  %v357 = vpack.c.bf16 %v310, %v291
  %v358 = vpack.c.bf16 %v315, %v296
  %v359 = vpack.c.bf16 %v333, %v333
  %v360 = vpack.c.bf16 %v332, %v332
  %v361 = vpack.c.bf16 %v331, %v331
  %v362 = vpack.c.bf16 %v330, %v330
  %v363 = vpack.c.bf16 %v329, %v329
  %v364 = vpack.c.bf16 %v334, %v334
  %366 = vset.pattern.permute.xlu0 0
  %367 = vperm.xlu0 %366, %v29
  %v368 = vpop.permute.xlu0 %367
  %vm370 = vcmask 588800
  %v372 = vsel %vm370, %v31, 0
  %v375 = vsel %vm53, %v359, 0
  %v378 = vsel %vm53, %v360, 0
  %v381 = vsel %vm53, %v361, 0
  %v384 = vsel %vm53, %v362, 0
  %v387 = vsel %vm53, %v363, 0
  %v390 = vsel %vm53, %v364, 0
  %392 = vmatpush.bf16.msra.mxu0 0
  %393 = vmatpush.bf16.msra.mxu0 0
  %394 = vmatpush.bf16.msra.mxu0 0
  %395 = vmatpush.bf16.msra.mxu0 %v375
  %396 = vmatpush.bf16.msra.mxu0 %v353
  %397 = vmatpush.bf16.msra.mxu0 %v347
  %398 = vmatpush.bf16.msra.mxu0 %v341
  %399 = vmatpush.bf16.msra.mxu0 %v335
  %400 = vmatmul.bf16.gmra.mxu0 %v372
  %v401 = vpop.f32.mrf.mxu0
  %v402 = vadd.f32 %v368, %v401
  %v403 = vpop.f32.mrf.mxu0
  %404 = vdwg.mxu0
  %405 = vmatpush.bf16.msra.mxu0 0
  %406 = vmatpush.bf16.msra.mxu0 0
  %407 = vmatpush.bf16.msra.mxu0 0
  %408 = vmatpush.bf16.msra.mxu0 %v378
  %409 = vmatpush.bf16.msra.mxu0 %v354
  %410 = vmatpush.bf16.msra.mxu0 %v348
  %411 = vmatpush.bf16.msra.mxu0 %v342
  %412 = vmatpush.bf16.msra.mxu0 %v336
  %413 = vmatmul.bf16.gmra.mxu0 %v372
  %v414 = vpop.f32.mrf.mxu0
  %v415 = vadd.f32 %v368, %v414
  %v416 = vpop.f32.mrf.mxu0
  %417 = vdwg.mxu0
  %418 = vmatpush.bf16.msra.mxu0 0
  %419 = vmatpush.bf16.msra.mxu0 0
  %420 = vmatpush.bf16.msra.mxu0 0
  %421 = vmatpush.bf16.msra.mxu0 %v381
  %422 = vmatpush.bf16.msra.mxu0 %v355
  %423 = vmatpush.bf16.msra.mxu0 %v349
  %424 = vmatpush.bf16.msra.mxu0 %v343
  %425 = vmatpush.bf16.msra.mxu0 %v337
  %426 = vmatmul.bf16.gmra.mxu0 %v372
  %v427 = vpop.f32.mrf.mxu0
  %v428 = vadd.f32 %v368, %v427
  %v429 = vpop.f32.mrf.mxu0
  %430 = vdwg.mxu0
  %431 = vmatpush.bf16.msra.mxu0 0
  %432 = vmatpush.bf16.msra.mxu0 0
  %433 = vmatpush.bf16.msra.mxu0 0
  %434 = vmatpush.bf16.msra.mxu0 %v384
  %435 = vmatpush.bf16.msra.mxu0 %v356
  %436 = vmatpush.bf16.msra.mxu0 %v350
  %437 = vmatpush.bf16.msra.mxu0 %v344
  %438 = vmatpush.bf16.msra.mxu0 %v338
  %439 = vmatmul.bf16.gmra.mxu0 %v372
  %v440 = vpop.f32.mrf.mxu0
  %v441 = vadd.f32 %v368, %v440
  %v442 = vpop.f32.mrf.mxu0
  %443 = vdwg.mxu0
  %444 = vmatpush.bf16.msra.mxu0 0
  %445 = vmatpush.bf16.msra.mxu0 0
  %446 = vmatpush.bf16.msra.mxu0 0
  %447 = vmatpush.bf16.msra.mxu0 %v387
  %448 = vmatpush.bf16.msra.mxu0 %v357
  %449 = vmatpush.bf16.msra.mxu0 %v351
  %450 = vmatpush.bf16.msra.mxu0 %v345
  %451 = vmatpush.bf16.msra.mxu0 %v339
  %452 = vmatmul.bf16.gmra.mxu0 %v372
  %v453 = vpop.f32.mrf.mxu0
  %v454 = vadd.f32 %v368, %v453
  %v455 = vpop.f32.mrf.mxu0
  %456 = vdwg.mxu0
  %457 = vmatpush.bf16.msra.mxu0 0
  %458 = vmatpush.bf16.msra.mxu0 0
  %459 = vmatpush.bf16.msra.mxu0 0
  %460 = vmatpush.bf16.msra.mxu0 %v390
  %461 = vmatpush.bf16.msra.mxu0 %v358
  %462 = vmatpush.bf16.msra.mxu0 %v352
  %463 = vmatpush.bf16.msra.mxu0 %v346
  %464 = vmatpush.bf16.msra.mxu0 %v340
  %465 = vmatmul.bf16.gmra.mxu0 %v372
  %v466 = vpop.f32.mrf.mxu0
  %v467 = vadd.f32 %v368, %v466
  %v468 = vpop.f32.mrf.mxu0
  %469 = vdwg.mxu0
  %v470 = vmax.f32 %v402, 0.0
  %v471 = vmax.f32 %v415, 0.0
  %v472 = vmax.f32 %v428, 0.0
  %v473 = vmax.f32 %v441, 0.0
  %v474 = vmax.f32 %v454, 0.0
  %v475 = vmax.f32 %v467, 0.0
  %v476 = vmul.f32 %v157, %v470
  %v477 = vmul.f32 %v158, %v471
  %v478 = vmul.f32 %v159, %v472
  %v479 = vmul.f32 %v160, %v473
  %v480 = vmul.f32 %v161, %v474
  %v481 = vmul.f32 %v162, %v475
  %v482 = vadd.f32 %v175, %v476
  %v483 = vadd.f32 %v176, %v477
  %v484 = vadd.f32 %v177, %v478
  %v485 = vadd.f32 %v178, %v479
  %v486 = vadd.f32 %v179, %v480
  %v487 = vadd.f32 %v180, %v481
  %488 = vrot.lane.b32.xlu0 %v482, 19
  %v489 = vpop.permute.xlu0 %488
  %490 = vrot.lane.b32.xlu0 %v483, 19
  %v491 = vpop.permute.xlu0 %490
  %492 = vrot.lane.b32.xlu0 %v484, 19
  %v493 = vpop.permute.xlu0 %492
  %494 = vrot.lane.b32.xlu0 %v485, 19
  %v495 = vpop.permute.xlu0 %494
  %496 = vrot.lane.b32.xlu0 %v486, 19
  %v497 = vpop.permute.xlu0 %496
  %498 = vrot.lane.b32.xlu0 %v487, 19
  %v499 = vpop.permute.xlu0 %498
  %v500 = vsel %vm195, %v497, %v499
  %v501 = vsel %vm195, %v495, %v497
  %v502 = vsel %vm195, %v493, %v495
  %v503 = vsel %vm195, %v491, %v493
  %v504 = vsel %vm195, %v489, %v491
  %v505 = vsel %vm195, %v499, %v489
  %506 = vrot.lane.b32.xlu0 %v482, 18
  %v507 = vpop.permute.xlu0 %506
  %508 = vrot.lane.b32.xlu0 %v483, 18
  %v509 = vpop.permute.xlu0 %508
  %510 = vrot.lane.b32.xlu0 %v484, 18
  %v511 = vpop.permute.xlu0 %510
  %512 = vrot.lane.b32.xlu0 %v485, 18
  %v513 = vpop.permute.xlu0 %512
  %514 = vrot.lane.b32.xlu0 %v486, 18
  %v515 = vpop.permute.xlu0 %514
  %516 = vrot.lane.b32.xlu0 %v487, 18
  %v517 = vpop.permute.xlu0 %516
  %v518 = vsel %vm214, %v515, %v517
  %v519 = vsel %vm214, %v513, %v515
  %v520 = vsel %vm214, %v511, %v513
  %v521 = vsel %vm214, %v509, %v511
  %v522 = vsel %vm214, %v507, %v509
  %v523 = vsel %vm214, %v517, %v507
  %524 = vrot.lane.b32.xlu0 %v482, 17
  %v525 = vpop.permute.xlu0 %524
  %526 = vrot.lane.b32.xlu0 %v483, 17
  %v527 = vpop.permute.xlu0 %526
  %528 = vrot.lane.b32.xlu0 %v484, 17
  %v529 = vpop.permute.xlu0 %528
  %530 = vrot.lane.b32.xlu0 %v485, 17
  %v531 = vpop.permute.xlu0 %530
  %532 = vrot.lane.b32.xlu0 %v486, 17
  %v533 = vpop.permute.xlu0 %532
  %534 = vrot.lane.b32.xlu0 %v487, 17
  %v535 = vpop.permute.xlu0 %534
  %v536 = vsel %vm233, %v533, %v535
  %v537 = vsel %vm233, %v531, %v533
  %v538 = vsel %vm233, %v529, %v531
  %v539 = vsel %vm233, %v527, %v529
  %v540 = vsel %vm233, %v525, %v527
  %v541 = vsel %vm233, %v535, %v525
  %542 = vrot.lane.b32.xlu0 %v482, 1
  %v543 = vpop.permute.xlu0 %542
  %544 = vrot.lane.b32.xlu0 %v483, 1
  %v545 = vpop.permute.xlu0 %544
  %546 = vrot.lane.b32.xlu0 %v484, 1
  %v547 = vpop.permute.xlu0 %546
  %548 = vrot.lane.b32.xlu0 %v485, 1
  %v549 = vpop.permute.xlu0 %548
  %550 = vrot.lane.b32.xlu0 %v486, 1
  %v551 = vpop.permute.xlu0 %550
  %552 = vrot.lane.b32.xlu0 %v487, 1
  %v553 = vpop.permute.xlu0 %552
  %v554 = vsel %vm252, %v551, %v553
  %v555 = vsel %vm252, %v549, %v551
  %v556 = vsel %vm252, %v547, %v549
  %v557 = vsel %vm252, %v545, %v547
  %v558 = vsel %vm252, %v543, %v545
  %v559 = vsel %vm252, %v553, %v543
  %560 = vrot.lane.b32.xlu0 %v482, 127
  %v561 = vpop.permute.xlu0 %560
  %562 = vrot.lane.b32.xlu0 %v483, 127
  %v563 = vpop.permute.xlu0 %562
  %564 = vrot.lane.b32.xlu0 %v484, 127
  %v565 = vpop.permute.xlu0 %564
  %566 = vrot.lane.b32.xlu0 %v485, 127
  %v567 = vpop.permute.xlu0 %566
  %568 = vrot.lane.b32.xlu0 %v486, 127
  %v569 = vpop.permute.xlu0 %568
  %570 = vrot.lane.b32.xlu0 %v487, 127
  %v571 = vpop.permute.xlu0 %570
  %v572 = vsel %vm271, %v569, %v571
  %v573 = vsel %vm271, %v567, %v569
  %v574 = vsel %vm271, %v565, %v567
  %v575 = vsel %vm271, %v563, %v565
  %v576 = vsel %vm271, %v561, %v563
  %v577 = vsel %vm271, %v571, %v561
  %578 = vrot.lane.b32.xlu0 %v482, 111
  %v579 = vpop.permute.xlu0 %578
  %580 = vrot.lane.b32.xlu0 %v483, 111
  %v581 = vpop.permute.xlu0 %580
  %582 = vrot.lane.b32.xlu0 %v484, 111
  %v583 = vpop.permute.xlu0 %582
  %584 = vrot.lane.b32.xlu0 %v485, 111
  %v585 = vpop.permute.xlu0 %584
  %586 = vrot.lane.b32.xlu0 %v486, 111
  %v587 = vpop.permute.xlu0 %586
  %588 = vrot.lane.b32.xlu0 %v487, 111
  %v589 = vpop.permute.xlu0 %588
  %v590 = vsel %vm290, %v587, %v589
  %v591 = vsel %vm290, %v585, %v587
  %v592 = vsel %vm290, %v583, %v585
  %v593 = vsel %vm290, %v581, %v583
  %v594 = vsel %vm290, %v579, %v581
  %v595 = vsel %vm290, %v589, %v579
  %596 = vrot.lane.b32.xlu0 %v482, 110
  %v597 = vpop.permute.xlu0 %596
  %598 = vrot.lane.b32.xlu0 %v483, 110
  %v599 = vpop.permute.xlu0 %598
  %600 = vrot.lane.b32.xlu0 %v484, 110
  %v601 = vpop.permute.xlu0 %600
  %602 = vrot.lane.b32.xlu0 %v485, 110
  %v603 = vpop.permute.xlu0 %602
  %604 = vrot.lane.b32.xlu0 %v486, 110
  %v605 = vpop.permute.xlu0 %604
  %606 = vrot.lane.b32.xlu0 %v487, 110
  %v607 = vpop.permute.xlu0 %606
  %v608 = vsel %vm309, %v605, %v607
  %v609 = vsel %vm309, %v603, %v605
  %v610 = vsel %vm309, %v601, %v603
  %v611 = vsel %vm309, %v599, %v601
  %v612 = vsel %vm309, %v597, %v599
  %v613 = vsel %vm309, %v607, %v597
  %614 = vrot.lane.b32.xlu0 %v482, 109
  %v615 = vpop.permute.xlu0 %614
  %616 = vrot.lane.b32.xlu0 %v483, 109
  %v617 = vpop.permute.xlu0 %616
  %618 = vrot.lane.b32.xlu0 %v484, 109
  %v619 = vpop.permute.xlu0 %618
  %620 = vrot.lane.b32.xlu0 %v485, 109
  %v621 = vpop.permute.xlu0 %620
  %622 = vrot.lane.b32.xlu0 %v486, 109
  %v623 = vpop.permute.xlu0 %622
  %624 = vrot.lane.b32.xlu0 %v487, 109
  %v625 = vpop.permute.xlu0 %624
  %v626 = vsel %vm328, %v623, %v625
  %v627 = vsel %vm328, %v621, %v623
  %v628 = vsel %vm328, %v619, %v621
  %v629 = vsel %vm328, %v617, %v619
  %v630 = vsel %vm328, %v615, %v617
  %v631 = vsel %vm328, %v625, %v615
  %v632 = vpack.c.bf16 %v523, %v505
  %v633 = vpack.c.bf16 %v522, %v504
  %v634 = vpack.c.bf16 %v521, %v503
  %v635 = vpack.c.bf16 %v520, %v502
  %v636 = vpack.c.bf16 %v519, %v501
  %v637 = vpack.c.bf16 %v518, %v500
  %v638 = vpack.c.bf16 %v559, %v541
  %v639 = vpack.c.bf16 %v558, %v540
  %v640 = vpack.c.bf16 %v557, %v539
  %v641 = vpack.c.bf16 %v556, %v538
  %v642 = vpack.c.bf16 %v555, %v537
  %v643 = vpack.c.bf16 %v554, %v536
  %v644 = vpack.c.bf16 %v576, %v482
  %v645 = vpack.c.bf16 %v575, %v483
  %v646 = vpack.c.bf16 %v574, %v484
  %v647 = vpack.c.bf16 %v573, %v485
  %v648 = vpack.c.bf16 %v572, %v486
  %v649 = vpack.c.bf16 %v577, %v487
  %v650 = vpack.c.bf16 %v612, %v594
  %v651 = vpack.c.bf16 %v611, %v593
  %v652 = vpack.c.bf16 %v610, %v592
  %v653 = vpack.c.bf16 %v609, %v591
  %v654 = vpack.c.bf16 %v608, %v590
  %v655 = vpack.c.bf16 %v613, %v595
  %v656 = vpack.c.bf16 %v630, %v630
  %v657 = vpack.c.bf16 %v629, %v629
  %v658 = vpack.c.bf16 %v628, %v628
  %v659 = vpack.c.bf16 %v627, %v627
  %v660 = vpack.c.bf16 %v626, %v626
  %v661 = vpack.c.bf16 %v631, %v631
  %v663 = vsel %vm53, %v656, 0
  %v666 = vsel %vm53, %v657, 0
  %v669 = vsel %vm53, %v658, 0
  %v672 = vsel %vm53, %v659, 0
  %v675 = vsel %vm53, %v660, 0
  %v678 = vsel %vm53, %v661, 0
  %680 = vmatpush.bf16.msra.mxu0 0
  %681 = vmatpush.bf16.msra.mxu0 0
  %682 = vmatpush.bf16.msra.mxu0 0
  %683 = vmatpush.bf16.msra.mxu0 %v663
  %684 = vmatpush.bf16.msra.mxu0 %v650
  %685 = vmatpush.bf16.msra.mxu0 %v644
  %686 = vmatpush.bf16.msra.mxu0 %v638
  %687 = vmatpush.bf16.msra.mxu0 %v632
  %688 = vmatmul.bf16.gmra.mxu0 %v372
  %v689 = vpop.f32.mrf.mxu0
  %v690 = vadd.f32 %v368, %v689
  %v691 = vpop.f32.mrf.mxu0
  %692 = vdwg.mxu0
  %693 = vmatpush.bf16.msra.mxu0 0
  %694 = vmatpush.bf16.msra.mxu0 0
  %695 = vmatpush.bf16.msra.mxu0 0
  %696 = vmatpush.bf16.msra.mxu0 %v666
  %697 = vmatpush.bf16.msra.mxu0 %v651
  %698 = vmatpush.bf16.msra.mxu0 %v645
  %699 = vmatpush.bf16.msra.mxu0 %v639
  %700 = vmatpush.bf16.msra.mxu0 %v633
  %701 = vmatmul.bf16.gmra.mxu0 %v372
  %v702 = vpop.f32.mrf.mxu0
  %v703 = vadd.f32 %v368, %v702
  %v704 = vpop.f32.mrf.mxu0
  %705 = vdwg.mxu0
  %706 = vmatpush.bf16.msra.mxu0 0
  %707 = vmatpush.bf16.msra.mxu0 0
  %708 = vmatpush.bf16.msra.mxu0 0
  %709 = vmatpush.bf16.msra.mxu0 %v669
  %710 = vmatpush.bf16.msra.mxu0 %v652
  %711 = vmatpush.bf16.msra.mxu0 %v646
  %712 = vmatpush.bf16.msra.mxu0 %v640
  %713 = vmatpush.bf16.msra.mxu0 %v634
  %714 = vmatmul.bf16.gmra.mxu0 %v372
  %v715 = vpop.f32.mrf.mxu0
  %v716 = vadd.f32 %v368, %v715
  %v717 = vpop.f32.mrf.mxu0
  %718 = vdwg.mxu0
  %719 = vmatpush.bf16.msra.mxu0 0
  %720 = vmatpush.bf16.msra.mxu0 0
  %721 = vmatpush.bf16.msra.mxu0 0
  %722 = vmatpush.bf16.msra.mxu0 %v672
  %723 = vmatpush.bf16.msra.mxu0 %v653
  %724 = vmatpush.bf16.msra.mxu0 %v647
  %725 = vmatpush.bf16.msra.mxu0 %v641
  %726 = vmatpush.bf16.msra.mxu0 %v635
  %727 = vmatmul.bf16.gmra.mxu0 %v372
  %v728 = vpop.f32.mrf.mxu0
  %v729 = vadd.f32 %v368, %v728
  %v730 = vpop.f32.mrf.mxu0
  %731 = vdwg.mxu0
  %732 = vmatpush.bf16.msra.mxu0 0
  %733 = vmatpush.bf16.msra.mxu0 0
  %734 = vmatpush.bf16.msra.mxu0 0
  %735 = vmatpush.bf16.msra.mxu0 %v675
  %736 = vmatpush.bf16.msra.mxu0 %v654
  %737 = vmatpush.bf16.msra.mxu0 %v648
  %738 = vmatpush.bf16.msra.mxu0 %v642
  %739 = vmatpush.bf16.msra.mxu0 %v636
  %740 = vmatmul.bf16.gmra.mxu0 %v372
  %v741 = vpop.f32.mrf.mxu0
  %v742 = vadd.f32 %v368, %v741
  %v743 = vpop.f32.mrf.mxu0
  %744 = vdwg.mxu0
  %745 = vmatpush.bf16.msra.mxu0 0
  %746 = vmatpush.bf16.msra.mxu0 0
  %747 = vmatpush.bf16.msra.mxu0 0
  %748 = vmatpush.bf16.msra.mxu0 %v678
  %749 = vmatpush.bf16.msra.mxu0 %v655
  %750 = vmatpush.bf16.msra.mxu0 %v649
  %751 = vmatpush.bf16.msra.mxu0 %v643
  %752 = vmatpush.bf16.msra.mxu0 %v637
  %753 = vmatmul.bf16.gmra.mxu0 %v372
  %v754 = vpop.f32.mrf.mxu0
  %v755 = vadd.f32 %v368, %v754
  %v756 = vpop.f32.mrf.mxu0
  %757 = vdwg.mxu0
  %v758 = vmax.f32 %v690, 0.0
  %v759 = vmax.f32 %v703, 0.0
  %v760 = vmax.f32 %v716, 0.0
  %v761 = vmax.f32 %v729, 0.0
  %v762 = vmax.f32 %v742, 0.0
  %v763 = vmax.f32 %v755, 0.0
  %v764 = vmul.f32 %v157, %v758
  %v765 = vmul.f32 %v158, %v759
  %v766 = vmul.f32 %v159, %v760
  %v767 = vmul.f32 %v160, %v761
  %v768 = vmul.f32 %v161, %v762
  %v769 = vmul.f32 %v162, %v763
  %v770 = vadd.f32 %v482, %v764
  %v771 = vadd.f32 %v483, %v765
  %v772 = vadd.f32 %v484, %v766
  %v773 = vadd.f32 %v485, %v767
  %v774 = vadd.f32 %v486, %v768
  %v775 = vadd.f32 %v487, %v769
  %776 = vrot.lane.b32.xlu0 %v770, 19
  %v777 = vpop.permute.xlu0 %776
  %778 = vrot.lane.b32.xlu0 %v771, 19
  %v779 = vpop.permute.xlu0 %778
  %780 = vrot.lane.b32.xlu0 %v772, 19
  %v781 = vpop.permute.xlu0 %780
  %782 = vrot.lane.b32.xlu0 %v773, 19
  %v783 = vpop.permute.xlu0 %782
  %784 = vrot.lane.b32.xlu0 %v774, 19
  %v785 = vpop.permute.xlu0 %784
  %786 = vrot.lane.b32.xlu0 %v775, 19
  %v787 = vpop.permute.xlu0 %786
  %v788 = vsel %vm195, %v785, %v787
  %v789 = vsel %vm195, %v783, %v785
  %v790 = vsel %vm195, %v781, %v783
  %v791 = vsel %vm195, %v779, %v781
  %v792 = vsel %vm195, %v777, %v779
  %v793 = vsel %vm195, %v787, %v777
  %794 = vrot.lane.b32.xlu0 %v770, 18
  %v795 = vpop.permute.xlu0 %794
  %796 = vrot.lane.b32.xlu0 %v771, 18
  %v797 = vpop.permute.xlu0 %796
  %798 = vrot.lane.b32.xlu0 %v772, 18
  %v799 = vpop.permute.xlu0 %798
  %800 = vrot.lane.b32.xlu0 %v773, 18
  %v801 = vpop.permute.xlu0 %800
  %802 = vrot.lane.b32.xlu0 %v774, 18
  %v803 = vpop.permute.xlu0 %802
  %804 = vrot.lane.b32.xlu0 %v775, 18
  %v805 = vpop.permute.xlu0 %804
  %v806 = vsel %vm214, %v803, %v805
  %v807 = vsel %vm214, %v801, %v803
  %v808 = vsel %vm214, %v799, %v801
  %v809 = vsel %vm214, %v797, %v799
  %v810 = vsel %vm214, %v795, %v797
  %v811 = vsel %vm214, %v805, %v795
  %812 = vrot.lane.b32.xlu0 %v770, 17
  %v813 = vpop.permute.xlu0 %812
  %814 = vrot.lane.b32.xlu0 %v771, 17
  %v815 = vpop.permute.xlu0 %814
  %816 = vrot.lane.b32.xlu0 %v772, 17
  %v817 = vpop.permute.xlu0 %816
  %818 = vrot.lane.b32.xlu0 %v773, 17
  %v819 = vpop.permute.xlu0 %818
  %820 = vrot.lane.b32.xlu0 %v774, 17
  %v821 = vpop.permute.xlu0 %820
  %822 = vrot.lane.b32.xlu0 %v775, 17
  %v823 = vpop.permute.xlu0 %822
  %v824 = vsel %vm233, %v821, %v823
  %v825 = vsel %vm233, %v819, %v821
  %v826 = vsel %vm233, %v817, %v819
  %v827 = vsel %vm233, %v815, %v817
  %v828 = vsel %vm233, %v813, %v815
  %v829 = vsel %vm233, %v823, %v813
  %830 = vrot.lane.b32.xlu0 %v770, 1
  %v831 = vpop.permute.xlu0 %830
  %832 = vrot.lane.b32.xlu0 %v771, 1
  %v833 = vpop.permute.xlu0 %832
  %834 = vrot.lane.b32.xlu0 %v772, 1
  %v835 = vpop.permute.xlu0 %834
  %836 = vrot.lane.b32.xlu0 %v773, 1
  %v837 = vpop.permute.xlu0 %836
  %838 = vrot.lane.b32.xlu0 %v774, 1
  %v839 = vpop.permute.xlu0 %838
  %840 = vrot.lane.b32.xlu0 %v775, 1
  %v841 = vpop.permute.xlu0 %840
  %v842 = vsel %vm252, %v839, %v841
  %v843 = vsel %vm252, %v837, %v839
  %v844 = vsel %vm252, %v835, %v837
  %v845 = vsel %vm252, %v833, %v835
  %v846 = vsel %vm252, %v831, %v833
  %v847 = vsel %vm252, %v841, %v831
  %848 = vrot.lane.b32.xlu0 %v770, 127
  %v849 = vpop.permute.xlu0 %848
  %850 = vrot.lane.b32.xlu0 %v771, 127
  %v851 = vpop.permute.xlu0 %850
  %852 = vrot.lane.b32.xlu0 %v772, 127
  %v853 = vpop.permute.xlu0 %852
  %854 = vrot.lane.b32.xlu0 %v773, 127
  %v855 = vpop.permute.xlu0 %854
  %856 = vrot.lane.b32.xlu0 %v774, 127
  %v857 = vpop.permute.xlu0 %856
  %858 = vrot.lane.b32.xlu0 %v775, 127
  %v859 = vpop.permute.xlu0 %858
  %v860 = vsel %vm271, %v857, %v859
  %v861 = vsel %vm271, %v855, %v857
  %v862 = vsel %vm271, %v853, %v855
  %v863 = vsel %vm271, %v851, %v853
  %v864 = vsel %vm271, %v849, %v851
  %v865 = vsel %vm271, %v859, %v849
  %866 = vrot.lane.b32.xlu0 %v770, 111
  %v867 = vpop.permute.xlu0 %866
  %868 = vrot.lane.b32.xlu0 %v771, 111
  %v869 = vpop.permute.xlu0 %868
  %870 = vrot.lane.b32.xlu0 %v772, 111
  %v871 = vpop.permute.xlu0 %870
  %872 = vrot.lane.b32.xlu0 %v773, 111
  %v873 = vpop.permute.xlu0 %872
  %874 = vrot.lane.b32.xlu0 %v774, 111
  %v875 = vpop.permute.xlu0 %874
  %876 = vrot.lane.b32.xlu0 %v775, 111
  %v877 = vpop.permute.xlu0 %876
  %v878 = vsel %vm290, %v875, %v877
  %v879 = vsel %vm290, %v873, %v875
  %v880 = vsel %vm290, %v871, %v873
  %v881 = vsel %vm290, %v869, %v871
  %v882 = vsel %vm290, %v867, %v869
  %v883 = vsel %vm290, %v877, %v867
  %884 = vrot.lane.b32.xlu0 %v770, 110
  %v885 = vpop.permute.xlu0 %884
  %886 = vrot.lane.b32.xlu0 %v771, 110
  %v887 = vpop.permute.xlu0 %886
  %888 = vrot.lane.b32.xlu0 %v772, 110
  %v889 = vpop.permute.xlu0 %888
  %890 = vrot.lane.b32.xlu0 %v773, 110
  %v891 = vpop.permute.xlu0 %890
  %892 = vrot.lane.b32.xlu0 %v774, 110
  %v893 = vpop.permute.xlu0 %892
  %894 = vrot.lane.b32.xlu0 %v775, 110
  %v895 = vpop.permute.xlu0 %894
  %v896 = vsel %vm309, %v893, %v895
  %v897 = vsel %vm309, %v891, %v893
  %v898 = vsel %vm309, %v889, %v891
  %v899 = vsel %vm309, %v887, %v889
  %v900 = vsel %vm309, %v885, %v887
  %v901 = vsel %vm309, %v895, %v885
  %902 = vrot.lane.b32.xlu0 %v770, 109
  %v903 = vpop.permute.xlu0 %902
  %904 = vrot.lane.b32.xlu0 %v771, 109
  %v905 = vpop.permute.xlu0 %904
  %906 = vrot.lane.b32.xlu0 %v772, 109
  %v907 = vpop.permute.xlu0 %906
  %908 = vrot.lane.b32.xlu0 %v773, 109
  %v909 = vpop.permute.xlu0 %908
  %910 = vrot.lane.b32.xlu0 %v774, 109
  %v911 = vpop.permute.xlu0 %910
  %912 = vrot.lane.b32.xlu0 %v775, 109
  %v913 = vpop.permute.xlu0 %912
  %v914 = vsel %vm328, %v911, %v913
  %v915 = vsel %vm328, %v909, %v911
  %v916 = vsel %vm328, %v907, %v909
  %v917 = vsel %vm328, %v905, %v907
  %v918 = vsel %vm328, %v903, %v905
  %v919 = vsel %vm328, %v913, %v903
  %v920 = vpack.c.bf16 %v811, %v793
  %v921 = vpack.c.bf16 %v810, %v792
  %v922 = vpack.c.bf16 %v809, %v791
  %v923 = vpack.c.bf16 %v808, %v790
  %v924 = vpack.c.bf16 %v807, %v789
  %v925 = vpack.c.bf16 %v806, %v788
  %v926 = vpack.c.bf16 %v847, %v829
  %v927 = vpack.c.bf16 %v846, %v828
  %v928 = vpack.c.bf16 %v845, %v827
  %v929 = vpack.c.bf16 %v844, %v826
  %v930 = vpack.c.bf16 %v843, %v825
  %v931 = vpack.c.bf16 %v842, %v824
  %v932 = vpack.c.bf16 %v864, %v770
  %v933 = vpack.c.bf16 %v863, %v771
  %v934 = vpack.c.bf16 %v862, %v772
  %v935 = vpack.c.bf16 %v861, %v773
  %v936 = vpack.c.bf16 %v860, %v774
  %v937 = vpack.c.bf16 %v865, %v775
  %v938 = vpack.c.bf16 %v900, %v882
  %v939 = vpack.c.bf16 %v899, %v881
  %v940 = vpack.c.bf16 %v898, %v880
  %v941 = vpack.c.bf16 %v897, %v879
  %v942 = vpack.c.bf16 %v896, %v878
  %v943 = vpack.c.bf16 %v901, %v883
  %v944 = vpack.c.bf16 %v918, %v918
  %v945 = vpack.c.bf16 %v917, %v917
  %v946 = vpack.c.bf16 %v916, %v916
  %v947 = vpack.c.bf16 %v915, %v915
  %v948 = vpack.c.bf16 %v914, %v914
  %v949 = vpack.c.bf16 %v919, %v919
  %v951 = vsel %vm53, %v944, 0
  %v954 = vsel %vm53, %v945, 0
  %v957 = vsel %vm53, %v946, 0
  %v960 = vsel %vm53, %v947, 0
  %v963 = vsel %vm53, %v948, 0
  %v966 = vsel %vm53, %v949, 0
  %968 = vmatpush.bf16.msra.mxu0 0
  %969 = vmatpush.bf16.msra.mxu0 0
  %970 = vmatpush.bf16.msra.mxu0 0
  %971 = vmatpush.bf16.msra.mxu0 %v951
  %972 = vmatpush.bf16.msra.mxu0 %v938
  %973 = vmatpush.bf16.msra.mxu0 %v932
  %974 = vmatpush.bf16.msra.mxu0 %v926
  %975 = vmatpush.bf16.msra.mxu0 %v920
  %976 = vmatmul.bf16.gmra.mxu0 %v372
  %v977 = vpop.f32.mrf.mxu0
  %v978 = vadd.f32 %v368, %v977
  %v979 = vpop.f32.mrf.mxu0
  %980 = vdwg.mxu0
  %981 = vmatpush.bf16.msra.mxu0 0
  %982 = vmatpush.bf16.msra.mxu0 0
  %983 = vmatpush.bf16.msra.mxu0 0
  %984 = vmatpush.bf16.msra.mxu0 %v954
  %985 = vmatpush.bf16.msra.mxu0 %v939
  %986 = vmatpush.bf16.msra.mxu0 %v933
  %987 = vmatpush.bf16.msra.mxu0 %v927
  %988 = vmatpush.bf16.msra.mxu0 %v921
  %989 = vmatmul.bf16.gmra.mxu0 %v372
  %v990 = vpop.f32.mrf.mxu0
  %v991 = vadd.f32 %v368, %v990
  %v992 = vpop.f32.mrf.mxu0
  %993 = vdwg.mxu0
  %994 = vmatpush.bf16.msra.mxu0 0
  %995 = vmatpush.bf16.msra.mxu0 0
  %996 = vmatpush.bf16.msra.mxu0 0
  %997 = vmatpush.bf16.msra.mxu0 %v957
  %998 = vmatpush.bf16.msra.mxu0 %v940
  %999 = vmatpush.bf16.msra.mxu0 %v934
  %1000 = vmatpush.bf16.msra.mxu0 %v928
  %1001 = vmatpush.bf16.msra.mxu0 %v922
  %1002 = vmatmul.bf16.gmra.mxu0 %v372
  %v1003 = vpop.f32.mrf.mxu0
  %v1004 = vadd.f32 %v368, %v1003
  %v1005 = vpop.f32.mrf.mxu0
  %1006 = vdwg.mxu0
  %1007 = vmatpush.bf16.msra.mxu0 0
  %1008 = vmatpush.bf16.msra.mxu0 0
  %1009 = vmatpush.bf16.msra.mxu0 0
  %1010 = vmatpush.bf16.msra.mxu0 %v960
  %1011 = vmatpush.bf16.msra.mxu0 %v941
  %1012 = vmatpush.bf16.msra.mxu0 %v935
  %1013 = vmatpush.bf16.msra.mxu0 %v929
  %1014 = vmatpush.bf16.msra.mxu0 %v923
  %1015 = vmatmul.bf16.gmra.mxu0 %v372
  %v1016 = vpop.f32.mrf.mxu0
  %v1017 = vadd.f32 %v368, %v1016
  %v1018 = vpop.f32.mrf.mxu0
  %1019 = vdwg.mxu0
  %1020 = vmatpush.bf16.msra.mxu0 0
  %1021 = vmatpush.bf16.msra.mxu0 0
  %1022 = vmatpush.bf16.msra.mxu0 0
  %1023 = vmatpush.bf16.msra.mxu0 %v963
  %1024 = vmatpush.bf16.msra.mxu0 %v942
  %1025 = vmatpush.bf16.msra.mxu0 %v936
  %1026 = vmatpush.bf16.msra.mxu0 %v930
  %1027 = vmatpush.bf16.msra.mxu0 %v924
  %1028 = vmatmul.bf16.gmra.mxu0 %v372
  %v1029 = vpop.f32.mrf.mxu0
  %v1030 = vadd.f32 %v368, %v1029
  %v1031 = vpop.f32.mrf.mxu0
  %1032 = vdwg.mxu0
  %1033 = vmatpush.bf16.msra.mxu0 0
  %1034 = vmatpush.bf16.msra.mxu0 0
  %1035 = vmatpush.bf16.msra.mxu0 0
  %1036 = vmatpush.bf16.msra.mxu0 %v966
  %1037 = vmatpush.bf16.msra.mxu0 %v943
  %1038 = vmatpush.bf16.msra.mxu0 %v937
  %1039 = vmatpush.bf16.msra.mxu0 %v931
  %1040 = vmatpush.bf16.msra.mxu0 %v925
  %1041 = vmatmul.bf16.gmra.mxu0 %v372
  %v1042 = vpop.f32.mrf.mxu0
  %v1043 = vadd.f32 %v368, %v1042
  %v1044 = vpop.f32.mrf.mxu0
  %1045 = vdwg.mxu0
  %v1046 = vmax.f32 %v978, 0.0
  %v1047 = vmax.f32 %v991, 0.0
  %v1048 = vmax.f32 %v1004, 0.0
  %v1049 = vmax.f32 %v1017, 0.0
  %v1050 = vmax.f32 %v1030, 0.0
  %v1051 = vmax.f32 %v1043, 0.0
  %1052 = vrot.lane.b32.xlu0 %v1046, 127
  %v1053 = vpop.permute.xlu0 %1052
  %1054 = vrot.lane.b32.xlu0 %v1047, 127
  %v1055 = vpop.permute.xlu0 %1054
  %1056 = vrot.lane.b32.xlu0 %v1048, 127
  %v1057 = vpop.permute.xlu0 %1056
  %1058 = vrot.lane.b32.xlu0 %v1049, 127
  %v1059 = vpop.permute.xlu0 %1058
  %1060 = vrot.lane.b32.xlu0 %v1050, 127
  %v1061 = vpop.permute.xlu0 %1060
  %1062 = vrot.lane.b32.xlu0 %v1051, 127
  %v1063 = vpop.permute.xlu0 %1062
  %v1064 = vsel %vm271, %v1061, %v1063
  %v1065 = vsel %vm271, %v1059, %v1061
  %v1066 = vsel %vm271, %v1057, %v1059
  %v1067 = vsel %vm271, %v1055, %v1057
  %v1068 = vsel %vm271, %v1053, %v1055
  %v1069 = vsel %vm271, %v1063, %v1053
  %v1070 = vmax.f32 %v1046, %v1068
  %v1071 = vmax.f32 %v1047, %v1067
  %v1072 = vmax.f32 %v1048, %v1066
  %v1073 = vmax.f32 %v1049, %v1065
  %v1074 = vmax.f32 %v1050, %v1064
  %v1075 = vmax.f32 %v1051, %v1069
  %1076 = vrot.lane.b32.xlu0 %v1070, 110
  %v1077 = vpop.permute.xlu0 %1076
  %1078 = vrot.lane.b32.xlu0 %v1071, 110
  %v1079 = vpop.permute.xlu0 %1078
  %1080 = vrot.lane.b32.xlu0 %v1072, 110
  %v1081 = vpop.permute.xlu0 %1080
  %1082 = vrot.lane.b32.xlu0 %v1073, 110
  %v1083 = vpop.permute.xlu0 %1082
  %1084 = vrot.lane.b32.xlu0 %v1074, 110
  %v1085 = vpop.permute.xlu0 %1084
  %1086 = vrot.lane.b32.xlu0 %v1075, 110
  %v1087 = vpop.permute.xlu0 %1086
  %v1088 = vsel %vm309, %v1085, %v1087
  %v1089 = vsel %vm309, %v1083, %v1085
  %v1090 = vsel %vm309, %v1081, %v1083
  %v1091 = vsel %vm309, %v1079, %v1081
  %v1092 = vsel %vm309, %v1077, %v1079
  %v1093 = vsel %vm309, %v1087, %v1077
  %v1094 = vmax.f32 %v1070, %v1092
  %v1095 = vmax.f32 %v1071, %v1091
  %v1096 = vmax.f32 %v1072, %v1090
  %v1097 = vmax.f32 %v1073, %v1089
  %v1098 = vmax.f32 %v1074, %v1088
  %v1099 = vmax.f32 %v1075, %v1093
  %v1100 = vpack.c.bf16 %v1095, %v1094
  %v1101 = vpack.c.bf16 %v1097, %v1096
  %v1102 = vpack.c.bf16 %v1099, %v1098
  %v1103 = vld [vmem:[%s6] sm:$0xf]
  %v1104 = vld [vmem:[%s6 + $0x4] sm:$0xf]
  %v1105 = vld [vmem:[%s6 + $0x8] sm:$0xf]
  %v1106 = vld [vmem:[%s6 + $0xc] sm:$0xf]
  %v1107 = vld [vmem:[%s6 + $0x10] sm:$0xf]
  %v1108 = vld [vmem:[%s6 + $0x14] sm:$0xf]
  %v1109 = vld [vmem:[%s6 + $0x18] sm:$0xf]
  %v1110 = vld [vmem:[%s6 + $0x1c] sm:$0xf]
  %v1111 = vld [vmem:[%s6 + $0x20] sm:$0xf]
  %v1112 = vld [vmem:[%s6 + $0x24] sm:$0xf]
  %v1113 = vld [vmem:[%s6 + $0x28] sm:$0xf]
  %v1114 = vld [vmem:[%s6 + $0x2c] sm:$0xf]
  %v1115 = vld [vmem:[%s6 + $0x30] sm:$0xf]
  %v1116 = vld [vmem:[%s6 + $0x34] sm:$0xf]
  %v1117 = vld [vmem:[%s6 + $0x38] sm:$0xf]
  %v1118 = vld [vmem:[%s6 + $0x3c] sm:$0xf]
  %v1119 = vld [vmem:[%s6 + $0x40] sm:$0xf]
  %v1120 = vld [vmem:[%s6 + $0x44] sm:$0xf]
  %v1121 = vld [vmem:[%s6 + $0x48] sm:$0xf]
  %v1122 = vld [vmem:[%s6 + $0x4c] sm:$0xf]
  %v1123 = vld [vmem:[%s6 + $0x50] sm:$0xf]
  %v1124 = vld [vmem:[%s6 + $0x54] sm:$0xf]
  %v1125 = vld [vmem:[%s6 + $0x58] sm:$0xf]
  %v1126 = vld [vmem:[%s6 + $0x5c] sm:$0xf]
  %v1127 = vld [vmem:[%s6 + $0x60] sm:$0xf]
  %v1128 = vld [vmem:[%s6 + $0x64] sm:$0xf]
  %v1129 = vld [vmem:[%s6 + $0x68] sm:$0xf]
  %v1130 = vld [vmem:[%s6 + $0x6c] sm:$0xf]
  %v1131 = vld [vmem:[%s6 + $0x70] sm:$0xf]
  %v1132 = vld [vmem:[%s6 + $0x74] sm:$0xf]
  %v1133 = vld [vmem:[%s6 + $0x78] sm:$0xf]
  %v1134 = vld [vmem:[%s6 + $0x7c] sm:$0xf]
  %v1135 = vld [vmem:[%s6 + $0x80] sm:$0xf]
  %v1136 = vld [vmem:[%s6 + $0x84] sm:$0xf]
  %v1137 = vld [vmem:[%s6 + $0x88] sm:$0xf]
  %v1138 = vld [vmem:[%s6 + $0x8c] sm:$0xf]
  %v1139 = vld [vmem:[%s6 + $0x90] sm:$0xf]
  %v1140 = vld [vmem:[%s6 + $0x94] sm:$0xf]
  %v1141 = vld [vmem:[%s6 + $0x98] sm:$0xf]
  %v1142 = vld [vmem:[%s6 + $0x9c] sm:$0xf]
  %v1143 = vld [vmem:[%s6 + $0xa0] sm:$0xf]
  %v1144 = vld [vmem:[%s6 + $0xa4] sm:$0xf]
  %v1145 = vld [vmem:[%s6 + $0xa8] sm:$0xf]
  %v1146 = vld [vmem:[%s6 + $0xac] sm:$0xf]
  %v1147 = vld [vmem:[%s6 + $0xb0] sm:$0xf]
  %v1148 = vld [vmem:[%s6 + $0xb4] sm:$0xf]
  %v1149 = vld [vmem:[%s6 + $0xb8] sm:$0xf]
  %v1150 = vld [vmem:[%s6 + $0xbc] sm:$0xf]
  %v1153 = vunpack.c.l.b16 %v1100
  %v1154 = vunpack.c.h.b16 %v1100
  %v1155 = vunpack.c.l.b16 %v1101
  %v1156 = vpack.c.b16 %v1153, %v1153
  %v1157 = vpack.c.b16 %v1154, %v1154
  %v1158 = vpack.c.b16 %v1155, %v1155
  %v1210 = vunpack.c.l.b16 %v1103
  %v1211 = vunpack.c.l.b16 %v1104
  %v1212 = vunpack.c.l.b16 %v1105
  %v1213 = vunpack.c.l.b16 %v1106
  %v1214 = vunpack.c.l.b16 %v1107
  %v1215 = vunpack.c.l.b16 %v1108
  %v1216 = vunpack.c.l.b16 %v1109
  %v1217 = vunpack.c.l.b16 %v1110
  %v1218 = vunpack.c.l.b16 %v1111
  %v1219 = vunpack.c.l.b16 %v1112
  %v1220 = vunpack.c.l.b16 %v1113
  %v1221 = vunpack.c.l.b16 %v1114
  %v1222 = vunpack.c.l.b16 %v1115
  %v1223 = vunpack.c.l.b16 %v1116
  %v1224 = vunpack.c.l.b16 %v1117
  %v1225 = vunpack.c.l.b16 %v1118
  %v1226 = vunpack.c.l.b16 %v1119
  %v1227 = vunpack.c.l.b16 %v1120
  %v1228 = vunpack.c.l.b16 %v1121
  %v1229 = vunpack.c.l.b16 %v1122
  %v1230 = vunpack.c.l.b16 %v1123
  %v1231 = vunpack.c.l.b16 %v1124
  %v1232 = vunpack.c.l.b16 %v1125
  %v1233 = vunpack.c.l.b16 %v1126
  %v1234 = vunpack.c.l.b16 %v1127
  %v1235 = vunpack.c.l.b16 %v1128
  %v1236 = vunpack.c.l.b16 %v1129
  %v1237 = vunpack.c.l.b16 %v1130
  %v1238 = vunpack.c.l.b16 %v1131
  %v1239 = vunpack.c.l.b16 %v1132
  %v1240 = vunpack.c.l.b16 %v1133
  %v1241 = vunpack.c.l.b16 %v1134
  %v1242 = vunpack.c.l.b16 %v1135
  %v1243 = vunpack.c.l.b16 %v1136
  %v1244 = vunpack.c.l.b16 %v1137
  %v1245 = vunpack.c.l.b16 %v1138
  %v1246 = vunpack.c.l.b16 %v1139
  %v1247 = vunpack.c.l.b16 %v1140
  %v1248 = vunpack.c.l.b16 %v1141
  %v1249 = vunpack.c.l.b16 %v1142
  %v1250 = vunpack.c.l.b16 %v1143
  %v1251 = vunpack.c.l.b16 %v1144
  %v1252 = vunpack.c.l.b16 %v1145
  %v1253 = vunpack.c.l.b16 %v1146
  %v1254 = vunpack.c.l.b16 %v1147
  %v1255 = vunpack.c.l.b16 %v1148
  %v1256 = vunpack.c.l.b16 %v1149
  %v1257 = vunpack.c.l.b16 %v1150
  %v1258 = vpack.c.b16 %v1211, %v1210
  %v1259 = vpack.c.b16 %v1213, %v1212
  %v1260 = vpack.c.b16 %v1215, %v1214
  %v1261 = vpack.c.b16 %v1217, %v1216
  %v1262 = vpack.c.b16 %v1219, %v1218
  %v1263 = vpack.c.b16 %v1221, %v1220
  %v1264 = vpack.c.b16 %v1223, %v1222
  %v1265 = vpack.c.b16 %v1225, %v1224
  %v1266 = vpack.c.b16 %v1227, %v1226
  %v1267 = vpack.c.b16 %v1229, %v1228
  %v1268 = vpack.c.b16 %v1231, %v1230
  %v1269 = vpack.c.b16 %v1233, %v1232
  %v1270 = vpack.c.b16 %v1235, %v1234
  %v1271 = vpack.c.b16 %v1237, %v1236
  %v1272 = vpack.c.b16 %v1239, %v1238
  %v1273 = vpack.c.b16 %v1241, %v1240
  %v1274 = vpack.c.b16 %v1243, %v1242
  %v1275 = vpack.c.b16 %v1245, %v1244
  %v1276 = vpack.c.b16 %v1247, %v1246
  %v1277 = vpack.c.b16 %v1249, %v1248
  %v1278 = vpack.c.b16 %v1251, %v1250
  %v1279 = vpack.c.b16 %v1253, %v1252
  %v1280 = vpack.c.b16 %v1255, %v1254
  %v1281 = vpack.c.b16 %v1257, %v1256
  %1306 = vmatpush.bf16.msra.mxu0 %v1265
  %1307 = vmatpush.bf16.msra.mxu0 %v1264
  %1308 = vmatpush.bf16.msra.mxu0 %v1263
  %1309 = vmatpush.bf16.msra.mxu0 %v1262
  %1310 = vmatpush.bf16.msra.mxu0 %v1261
  %1311 = vmatpush.bf16.msra.mxu0 %v1260
  %1312 = vmatpush.bf16.msra.mxu0 %v1259
  %1313 = vmatpush.bf16.msra.mxu0 %v1258
  %1314 = vmatmul.bf16.gmra.mxu0 %v1156
  %v1315 = vpop.f32.mrf.mxu0
  %v1316 = vadd.f32 0.0, %v1315
  %v1317 = vpop.f32.mrf.mxu0
  %1318 = vdwg.mxu0
  %1319 = vmatpush.bf16.msra.mxu0 %v1273
  %1320 = vmatpush.bf16.msra.mxu0 %v1272
  %1321 = vmatpush.bf16.msra.mxu0 %v1271
  %1322 = vmatpush.bf16.msra.mxu0 %v1270
  %1323 = vmatpush.bf16.msra.mxu0 %v1269
  %1324 = vmatpush.bf16.msra.mxu0 %v1268
  %1325 = vmatpush.bf16.msra.mxu0 %v1267
  %1326 = vmatpush.bf16.msra.mxu0 %v1266
  %1327 = vmatmul.bf16.gmra.mxu0 %v1157
  %v1328 = vpop.f32.mrf.mxu0
  %v1329 = vadd.f32 %v1316, %v1328
  %v1330 = vpop.f32.mrf.mxu0
  %1331 = vdwg.mxu0
  %1332 = vmatpush.bf16.msra.mxu0 %v1281
  %1333 = vmatpush.bf16.msra.mxu0 %v1280
  %1334 = vmatpush.bf16.msra.mxu0 %v1279
  %1335 = vmatpush.bf16.msra.mxu0 %v1278
  %1336 = vmatpush.bf16.msra.mxu0 %v1277
  %1337 = vmatpush.bf16.msra.mxu0 %v1276
  %1338 = vmatpush.bf16.msra.mxu0 %v1275
  %1339 = vmatpush.bf16.msra.mxu0 %v1274
  %1340 = vmatmul.bf16.gmra.mxu0 %v1158
  %v1341 = vpop.f32.mrf.mxu0
  %v1342 = vadd.f32 %v1329, %v1341
  %v1343 = vpop.f32.mrf.mxu0
  %1344 = vdwg.mxu0
  %v1346 = vunpack.c.h.b16 %v1101
  %v1347 = vunpack.c.l.b16 %v1102
  %v1348 = vunpack.c.h.b16 %v1102
  %v1349 = vpack.c.b16 %v1346, %v1346
  %v1350 = vpack.c.b16 %v1347, %v1347
  %v1351 = vpack.c.b16 %v1348, %v1348
  %1355 = vmatpush.bf16.msra.mxu0 %v1265
  %1356 = vmatpush.bf16.msra.mxu0 %v1264
  %1357 = vmatpush.bf16.msra.mxu0 %v1263
  %1358 = vmatpush.bf16.msra.mxu0 %v1262
  %1359 = vmatpush.bf16.msra.mxu0 %v1261
  %1360 = vmatpush.bf16.msra.mxu0 %v1260
  %1361 = vmatpush.bf16.msra.mxu0 %v1259
  %1362 = vmatpush.bf16.msra.mxu0 %v1258
  %1363 = vmatmul.bf16.gmra.mxu0 %v1349
  %v1364 = vpop.f32.mrf.mxu0
  %v1365 = vadd.f32 0.0, %v1364
  %v1366 = vpop.f32.mrf.mxu0
  %1367 = vdwg.mxu0
  %1368 = vmatpush.bf16.msra.mxu0 %v1273
  %1369 = vmatpush.bf16.msra.mxu0 %v1272
  %1370 = vmatpush.bf16.msra.mxu0 %v1271
  %1371 = vmatpush.bf16.msra.mxu0 %v1270
  %1372 = vmatpush.bf16.msra.mxu0 %v1269
  %1373 = vmatpush.bf16.msra.mxu0 %v1268
  %1374 = vmatpush.bf16.msra.mxu0 %v1267
  %1375 = vmatpush.bf16.msra.mxu0 %v1266
  %1376 = vmatmul.bf16.gmra.mxu0 %v1350
  %v1377 = vpop.f32.mrf.mxu0
  %v1378 = vadd.f32 %v1365, %v1377
  %v1379 = vpop.f32.mrf.mxu0
  %1380 = vdwg.mxu0
  %1381 = vmatpush.bf16.msra.mxu0 %v1281
  %1382 = vmatpush.bf16.msra.mxu0 %v1280
  %1383 = vmatpush.bf16.msra.mxu0 %v1279
  %1384 = vmatpush.bf16.msra.mxu0 %v1278
  %1385 = vmatpush.bf16.msra.mxu0 %v1277
  %1386 = vmatpush.bf16.msra.mxu0 %v1276
  %1387 = vmatpush.bf16.msra.mxu0 %v1275
  %1388 = vmatpush.bf16.msra.mxu0 %v1274
  %1389 = vmatmul.bf16.gmra.mxu0 %v1351
  %v1390 = vpop.f32.mrf.mxu0
  %v1391 = vadd.f32 %v1378, %v1390
  %v1392 = vpop.f32.mrf.mxu0
  %1393 = vdwg.mxu0
  %1395 = vrot.lane.b32.xlu0 %v1391, 64
  %v1396 = vpop.permute.xlu0 %1395
  %vm1398 = vcmask 523264
  %v1399 = vsel %vm1398, %v1342, %v1396
  %1400 = vst [vmem:[%s7] sm:$0xff] %v1399
  // Predicated region
  $region30: #{dense_block_forward.1} parent=0 // pred_check
    _
  $region31: #{dense_block_forward.1} parent=0 // pred_check_branch
    %1402 = sbr.rel (0) target = $region33
  $region32: #{dense_block_forward.1} parent=0 // pred_region
    _
  $region33: #{dense_block_forward.1} parent=0 // pred_fallthru
    _
  // Predicated region
  $region34: #{dense_block_forward.1} parent=0 // pred_check
    _
  $region35: #{dense_block_forward.1} parent=0 // pred_check_branch
    %1404 = sbr.rel (0) target = $region37
  $region36: #{dense_block_forward.1} parent=0 // pred_region
    _
  $region37: #{dense_block_forward.1} parent=0 // pred_fallthru
    _

</llo_original>
